<compile_context>
chip_gen: v5e
topology: v5e:2x2
jax: 0.10.0
libtpu: 0.0.40
codegen_flags: <defaults>
</compile_context>

<pallas_src>
import jax
import jax.numpy as jnp
from jax.experimental import pallas as pl
from jax.experimental.pallas import tpu as pltpu


def graph_gnn_kernel(emb_ref, ntype_ref, ahat_ref,
                     w0_ref, w1_ref, bconv_ref,
                     wgc_ref, wgt_ref, bgcn_ref,
                     wlmax_ref, wlmean_ref, blin_ref,
                     out_ref):
    # Per-block (Gb graphs, M = Gb*N flattened nodes):
    #   emb_ref   (1, L, M, C) bf16     ntype_ref (1, M, 1) int32
    #   ahat_ref  (1, M, M)    bf16     out_ref   (1, Gb, num_classes) f32
    L = emb_ref.shape[1]
    M = emb_ref.shape[2]
    Gb = out_ref.shape[1]
    N = M // Gb

    # --- word_conv: Conv1d(50, 50, k=2) followed by mean over time ---
    # mean_t conv(x)[:, t] == W0 @ mean(x[0:L-1]) + W1 @ mean(x[1:L]) + b
    # Accumulate the L-sum into ONE f32 tile (no full f32 copy of the slab).
    first = emb_ref[0, 0].astype(jnp.float32)         # (M, C)
    last = emb_ref[0, L - 1].astype(jnp.float32)      # (M, C)
    total = first + last
    for t in range(1, L - 1):                         # L is small and static
        total = total + emb_ref[0, t].astype(jnp.float32)
    inv = jnp.float32(1.0 / (L - 1))
    m0 = (total - last) * inv                         # mean of tokens 0..L-2
    m1 = (total - first) * inv                        # mean of tokens 1..L-1
    conv = (jnp.dot(m0.astype(jnp.bfloat16), w0_ref[...],
                    preferred_element_type=jnp.float32)
            + jnp.dot(m1.astype(jnp.bfloat16), w1_ref[...],
                      preferred_element_type=jnp.float32)
            + bconv_ref[...])                         # (M, C) f32

    # --- node type one-hot (8 classes); type == -1 => all-zero feature row ---
    ntype = ntype_ref[0]                              # (M, 1) int32
    onehot = (jax.lax.broadcasted_iota(jnp.int32, (M, 8), 1)
              == ntype).astype(jnp.float32)           # (M, 8); -1 -> zeros
    valid = (ntype >= 0).astype(jnp.float32)          # (M, 1)

    # --- GCNConv: h = A_hat @ (X @ W) + b.  W split so no 58-lane concat:
    #     X @ W == (conv*valid) @ W[:50] + onehot @ W[50:]
    xw = (jnp.dot((conv * valid).astype(jnp.bfloat16), wgc_ref[...],
                  preferred_element_type=jnp.float32)
          + jnp.dot(onehot.astype(jnp.bfloat16), wgt_ref[...],
                    preferred_element_type=jnp.float32))          # (M, D)
    # Block-diagonal A_hat keeps graphs independent; bf16 x bf16 on the MXU.
    h = jnp.dot(ahat_ref[0], xw.astype(jnp.bfloat16),
                preferred_element_type=jnp.float32) + bgcn_ref[...]

    # --- F.normalize(p=2, dim=1, eps=1e-12) then ReLU (all f32) ---
    sumsq = jnp.sum(h * h, axis=1, keepdims=True)
    h = h * jax.lax.rsqrt(jnp.maximum(sumsq, 1e-24))  # == x / max(||x||, 1e-12)
    h = jnp.maximum(h, 0.0)

    # --- per-graph global max / mean pooling over the N nodes of each graph ---
    h3 = h.reshape(Gb, N, h.shape[1])                 # (Gb, N, D)
    gmax = jnp.max(h3, axis=1)                        # (Gb, D)
    gmean = jnp.mean(h3, axis=1)                      # (Gb, D)

    # --- classifier with split weight: cat([gmax,gmean]) @ W == gmax@W0 + gmean@W1
    out = (jnp.dot(gmax.astype(jnp.bfloat16), wlmax_ref[...],
                   preferred_element_type=jnp.float32)
           + jnp.dot(gmean.astype(jnp.bfloat16), wlmean_ref[...],
                     preferred_element_type=jnp.float32)
           + blin_ref[...])                           # (Gb, num_classes)
    out_ref[...] = out[None]


def _pick_graphs_per_block(num_graphs, nodes_per_graph, target_rows=256):
    """Largest divisor Gb of num_graphs with Gb*N <= target_rows (MXU row
    fill: 128 saturates v5e, 256 saturates v6e/v7x) while keeping >= 2 grid
    steps so v7x's two TensorCores both receive work."""
    best = 1
    for gb in range(1, num_graphs + 1):
        if num_graphs % gb != 0:
            continue
        if gb * nodes_per_graph > target_rows:
            continue
        if (num_graphs // gb) < 2 and gb != 1:
            continue
        best = max(best, gb)
    return best


def graph_gnn_forward(emb_lnc, ntype, a_hat, params, graphs_per_block=None):
    """emb_lnc: (G, L, N, C); ntype: (G, N) int; a_hat: (G, N, N) normalized."""
    G, L, N, C = emb_lnc.shape
    D = params["gcn_w_conv"].shape[1]
    num_classes = params["lin_w_max"].shape[1]

    Gb = graphs_per_block or _pick_graphs_per_block(G, N)
    assert G % Gb == 0, (G, Gb)
    n_blocks = G // Gb
    M = Gb * N

    # (G, L, N, C) -> (n_blocks, L, Gb*N, C): flattened node axis per block.
    emb_b = (emb_lnc.reshape(n_blocks, Gb, L, N, C)
             .transpose(0, 2, 1, 3, 4)
             .reshape(n_blocks, L, M, C)
             .astype(jnp.bfloat16))
    ntype_b = ntype.astype(jnp.int32).reshape(n_blocks, M, 1)

    # Block-diagonal normalized adjacency per block, bf16 (MXU-native).
    ahat_g = a_hat.astype(jnp.float32).reshape(n_blocks, Gb, N, N)
    eye_gb = jnp.eye(Gb, dtype=jnp.float32)
    ahat_bd = (jnp.einsum("bgij,gh->bgihj", ahat_g, eye_gb)
               .reshape(n_blocks, M, M)
               .astype(jnp.bfloat16))

    weight_inputs = [
        params["conv_w0"].astype(jnp.bfloat16),                  # (C, C)
        params["conv_w1"].astype(jnp.bfloat16),                  # (C, C)
        params["conv_b"].reshape(1, C).astype(jnp.float32),
        params["gcn_w_conv"].astype(jnp.bfloat16),               # (C, D)
        params["gcn_w_type"].astype(jnp.bfloat16),               # (8, D)
        params["gcn_b"].reshape(1, D).astype(jnp.float32),
        params["lin_w_max"].astype(jnp.bfloat16),                # (D, classes)
        params["lin_w_mean"].astype(jnp.bfloat16),               # (D, classes)
        params["lin_b"].reshape(1, num_classes).astype(jnp.float32),
    ]

    in_specs = [
        pl.BlockSpec((1, L, M, C), lambda b: (b, 0, 0, 0)),      # emb block
        pl.BlockSpec((1, M, 1), lambda b: (b, 0, 0)),            # node types
        pl.BlockSpec((1, M, M), lambda b: (b, 0, 0)),            # block-diag A
    ] + [
        pl.BlockSpec(tuple(w.shape), lambda b, _n=w.ndim: (0,) * _n)
        for w in weight_inputs                                    # resident
    ]

    out = pl.pallas_call(
        graph_gnn_kernel,
        grid=(n_blocks,),
        in_specs=in_specs,
        out_specs=pl.BlockSpec((1, Gb, num_classes), lambda b: (b, 0, 0)),
        out_shape=jax.ShapeDtypeStruct((n_blocks, Gb, num_classes),
                                       jnp.float32),
        compiler_params=pltpu.CompilerParams(
            dimension_semantics=("parallel",)),
    )(emb_b, ntype_b, ahat_bd, *weight_inputs)
    return out.reshape(G, num_classes)


def gcn_norm_dense(edge_index, num_nodes):
    """Dense D^-1/2 (A + I) D^-1/2 with A[dst, src] = 1 (source -> target)."""
    src, dst = edge_index[0], edge_index[1]
    a = jnp.zeros((num_nodes, num_nodes), jnp.float32)
    a = a.at[dst, src].set(1.0)
    a = a + jnp.eye(num_nodes, dtype=jnp.float32)
    deg = jnp.sum(a, axis=1)
    dinv = jax.lax.rsqrt(deg)
    return a * dinv[:, None] * dinv[None, :]


def _bf16r(x):
    return x.astype(jnp.bfloat16).astype(jnp.float32)


def reference_forward(emb_lnc, ntype, a_hat, params):
    """Pure-JAX reference using the same bf16-rounded operands as the kernel."""
    e = emb_lnc.astype(jnp.float32)                           # (G, L, N, C)
    m0 = jnp.mean(e[:, :-1], axis=1)                          # (G, N, C)
    m1 = jnp.mean(e[:, 1:], axis=1)
    conv = (_bf16r(m0) @ _bf16r(params["conv_w0"])
            + _bf16r(m1) @ _bf16r(params["conv_w1"])
            + params["conv_b"].reshape(1, 1, -1))
    onehot = (ntype[..., None] == jnp.arange(8)).astype(jnp.float32)
    valid = (ntype >= 0).astype(jnp.float32)[..., None]
    xw = (_bf16r(conv * valid) @ _bf16r(params["gcn_w_conv"])
          + onehot @ _bf16r(params["gcn_w_type"]))
    # Mirror the kernel's bf16 A_hat @ bf16 XW (f32 accumulation).
    h = (jnp.einsum("gij,gjd->gid", _bf16r(a_hat), _bf16r(xw))
         + params["gcn_b"].reshape(1, 1, -1))
    sumsq = jnp.sum(h * h, axis=-1, keepdims=True)
    h = h * jax.lax.rsqrt(jnp.maximum(sumsq, 1e-24))
    h = jnp.maximum(h, 0.0)
    gmax = jnp.max(h, axis=1)
    gmean = jnp.mean(h, axis=1)
    return (_bf16r(gmax) @ _bf16r(params["lin_w_max"])
            + _bf16r(gmean) @ _bf16r(params["lin_w_mean"])
            + params["lin_b"].reshape(1, -1))


if __name__ == "__main__":
    key = jax.random.PRNGKey(0)
    k = jax.random.split(key, 12)

    # Sizes implied by the module: word_embed_size must be 50 (Conv1d in/out=50)
    # and node feature dim = 50 + 8 = 58.
    G = 16                # graphs in the batch
    N_NODES = 16          # nodes per graph  (Gb*N -> 128-row MXU fill, 2 steps)
    L_TOK = 8             # word tokens per node (x has L_TOK + 1 columns)
    VOCAB = 30            # word2vec rows (lookup table has VOCAB + 1 rows)
    WORD_DIM = 50
    OUT_DIM = 32          # out_features_dim
    NUM_CLASSES = 4

    # --- frozen embedding table: row 0 = unknown word (zeros) ---
    word2vec = jax.random.normal(k[0], (VOCAB, WORD_DIM), jnp.float32) * 0.1
    lookup_table = jnp.concatenate(
        [jnp.zeros((1, WORD_DIM), jnp.float32), word2vec], axis=0)

    # --- synthetic node inputs: x = [tokens..., node_type] per graph ---
    tokens = jax.random.randint(k[1], (G, N_NODES, L_TOK), 1, VOCAB + 1)
    node_type = jax.random.randint(k[2], (G, N_NODES), 0, 8).astype(jnp.int32)
    node_type = node_type.at[:, 3].set(-1)   # one "empty" node per graph

    # --- symmetric chain graph, shared adjacency for all graphs ---
    s = jnp.arange(N_NODES - 1, dtype=jnp.int32)
    edge_index = jnp.stack([jnp.concatenate([s, s + 1]),
                            jnp.concatenate([s + 1, s])], axis=0)
    a_hat = jnp.tile(gcn_norm_dense(edge_index, N_NODES)[None], (G, 1, 1))

    # --- deterministic parameters (shapes from the module __init__) ---
    conv_w = jax.random.normal(k[3], (WORD_DIM, WORD_DIM, 2), jnp.float32) * 0.1
    gcn_w = jax.random.normal(k[5], (WORD_DIM + 8, OUT_DIM), jnp.float32) * 0.1
    lin_w = jax.random.normal(k[7], (OUT_DIM * 2, NUM_CLASSES), jnp.float32) * 0.1
    params = {
        "conv_w0": conv_w[:, :, 0].T,                 # (50, 50) == weight[:,:,0].T
        "conv_w1": conv_w[:, :, 1].T,                 # (50, 50)
        "conv_b": jax.random.normal(k[4], (WORD_DIM,), jnp.float32) * 0.1,
        "gcn_w_conv": gcn_w[:WORD_DIM],               # (50, D)
        "gcn_w_type": gcn_w[WORD_DIM:],               # (8, D)
        "gcn_b": jax.random.normal(k[6], (OUT_DIM,), jnp.float32) * 0.1,
        "lin_w_max": lin_w[:OUT_DIM],                 # (D, classes)
        "lin_w_mean": lin_w[OUT_DIM:],                # (D, classes)
        "lin_b": jax.random.normal(k[8], (NUM_CLASSES,), jnp.float32) * 0.1,
    }

    # --- JAX glue: embedding gather, transpose to (G, L, N, C), bf16 cast ---
    emb = lookup_table[tokens]                            # (G, N, L, 50)
    emb_lnc = jnp.transpose(emb, (0, 2, 1, 3)).astype(jnp.bfloat16)

    out = graph_gnn_forward(emb_lnc, node_type, a_hat, params)
    out = jax.block_until_ready(out)
    assert out.shape == (G, NUM_CLASSES)

    ref = reference_forward(emb_lnc, node_type, a_hat, params)
    assert jnp.allclose(out, ref, atol=1e-2, rtol=1e-2), \
        float(jnp.max(jnp.abs(out - ref)))
    print("KERNEL_OK")
</pallas_src>

<mosaic_0001>
module attributes {stable_mosaic.version = 11 : i64} {
  func.func @graph_gnn_kernel(%arg0: i32, %arg1: memref<1x8x128x50xbf16, #tpu.memory_space<vmem>>, %arg2: memref<1x128x1xi32, #tpu.memory_space<vmem>>, %arg3: memref<1x128x128xbf16, #tpu.memory_space<vmem>>, %arg4: memref<50x50xbf16, #tpu.memory_space<vmem>>, %arg5: memref<50x50xbf16, #tpu.memory_space<vmem>>, %arg6: memref<1x50xf32, #tpu.memory_space<vmem>>, %arg7: memref<50x32xbf16, #tpu.memory_space<vmem>>, %arg8: memref<8x32xbf16, #tpu.memory_space<vmem>>, %arg9: memref<1x32xf32, #tpu.memory_space<vmem>>, %arg10: memref<32x4xbf16, #tpu.memory_space<vmem>>, %arg11: memref<32x4xbf16, #tpu.memory_space<vmem>>, %arg12: memref<1x4xf32, #tpu.memory_space<vmem>>, %arg13: memref<1x8x4xf32, #tpu.memory_space<vmem>>) attributes {dimension_semantics = [#tpu.dimension_semantics<parallel>], iteration_bounds = array<i64: 2>, scalar_prefetch = 0 : i64, scratch_operands = 0 : i64, tpu.core_type = #tpu.core_type<tc>, window_params = [{transform_indices = @transform_0, window_bounds = array<i64: 1, 8, 128, 50>}, {transform_indices = @transform_1, window_bounds = array<i64: 1, 128, 1>}, {transform_indices = @transform_2, window_bounds = array<i64: 1, 128, 128>}, {pipeline_mode = #tpu.pipeline_mode<synchronous>, transform_indices = @transform_3, window_bounds = array<i64: 50, 50>}, {pipeline_mode = #tpu.pipeline_mode<synchronous>, transform_indices = @transform_4, window_bounds = array<i64: 50, 50>}, {pipeline_mode = #tpu.pipeline_mode<synchronous>, transform_indices = @transform_5, window_bounds = array<i64: 1, 50>}, {pipeline_mode = #tpu.pipeline_mode<synchronous>, transform_indices = @transform_6, window_bounds = array<i64: 50, 32>}, {pipeline_mode = #tpu.pipeline_mode<synchronous>, transform_indices = @transform_7, window_bounds = array<i64: 8, 32>}, {pipeline_mode = #tpu.pipeline_mode<synchronous>, transform_indices = @transform_8, window_bounds = array<i64: 1, 32>}, {pipeline_mode = #tpu.pipeline_mode<synchronous>, transform_indices = @transform_9, window_bounds = array<i64: 32, 4>}, {pipeline_mode = #tpu.pipeline_mode<synchronous>, transform_indices = @transform_10, window_bounds = array<i64: 32, 4>}, {pipeline_mode = #tpu.pipeline_mode<synchronous>, transform_indices = @transform_11, window_bounds = array<i64: 1, 4>}, {transform_indices = @transform_12, window_bounds = array<i64: 1, 8, 4>}]} {
    %c0 = arith.constant 0 : index
    %c0_0 = arith.constant 0 : index
    %c0_1 = arith.constant 0 : index
    %c0_2 = arith.constant 0 : index
    %0 = vector.load %arg1[%c0, %c0_0, %c0_1, %c0_2] : memref<1x8x128x50xbf16, #tpu.memory_space<vmem>>, vector<1x1x128x50xbf16>
    %1 = vector.shape_cast %0 : vector<1x1x128x50xbf16> to vector<128x50xbf16>
    %2 = arith.extf %1 : vector<128x50xbf16> to vector<128x50xf32>
    %c0_3 = arith.constant 0 : index
    %c7 = arith.constant 7 : index
    %c0_4 = arith.constant 0 : index
    %c0_5 = arith.constant 0 : index
    %3 = vector.load %arg1[%c0_3, %c7, %c0_4, %c0_5] : memref<1x8x128x50xbf16, #tpu.memory_space<vmem>>, vector<1x1x128x50xbf16>
    %4 = vector.shape_cast %3 : vector<1x1x128x50xbf16> to vector<128x50xbf16>
    %5 = arith.extf %4 : vector<128x50xbf16> to vector<128x50xf32>
    %6 = arith.addf %2, %5 : vector<128x50xf32>
    %c0_6 = arith.constant 0 : index
    %c1 = arith.constant 1 : index
    %c0_7 = arith.constant 0 : index
    %c0_8 = arith.constant 0 : index
    %7 = vector.load %arg1[%c0_6, %c1, %c0_7, %c0_8] : memref<1x8x128x50xbf16, #tpu.memory_space<vmem>>, vector<1x1x128x50xbf16>
    %8 = vector.shape_cast %7 : vector<1x1x128x50xbf16> to vector<128x50xbf16>
    %9 = arith.extf %8 : vector<128x50xbf16> to vector<128x50xf32>
    %10 = arith.addf %6, %9 : vector<128x50xf32>
    %c0_9 = arith.constant 0 : index
    %c2 = arith.constant 2 : index
    %c0_10 = arith.constant 0 : index
    %c0_11 = arith.constant 0 : index
    %11 = vector.load %arg1[%c0_9, %c2, %c0_10, %c0_11] : memref<1x8x128x50xbf16, #tpu.memory_space<vmem>>, vector<1x1x128x50xbf16>
    %12 = vector.shape_cast %11 : vector<1x1x128x50xbf16> to vector<128x50xbf16>
    %13 = arith.extf %12 : vector<128x50xbf16> to vector<128x50xf32>
    %14 = arith.addf %10, %13 : vector<128x50xf32>
    %c0_12 = arith.constant 0 : index
    %c3 = arith.constant 3 : index
    %c0_13 = arith.constant 0 : index
    %c0_14 = arith.constant 0 : index
    %15 = vector.load %arg1[%c0_12, %c3, %c0_13, %c0_14] : memref<1x8x128x50xbf16, #tpu.memory_space<vmem>>, vector<1x1x128x50xbf16>
    %16 = vector.shape_cast %15 : vector<1x1x128x50xbf16> to vector<128x50xbf16>
    %17 = arith.extf %16 : vector<128x50xbf16> to vector<128x50xf32>
    %18 = arith.addf %14, %17 : vector<128x50xf32>
    %c0_15 = arith.constant 0 : index
    %c4 = arith.constant 4 : index
    %c0_16 = arith.constant 0 : index
    %c0_17 = arith.constant 0 : index
    %19 = vector.load %arg1[%c0_15, %c4, %c0_16, %c0_17] : memref<1x8x128x50xbf16, #tpu.memory_space<vmem>>, vector<1x1x128x50xbf16>
    %20 = vector.shape_cast %19 : vector<1x1x128x50xbf16> to vector<128x50xbf16>
    %21 = arith.extf %20 : vector<128x50xbf16> to vector<128x50xf32>
    %22 = arith.addf %18, %21 : vector<128x50xf32>
    %c0_18 = arith.constant 0 : index
    %c5 = arith.constant 5 : index
    %c0_19 = arith.constant 0 : index
    %c0_20 = arith.constant 0 : index
    %23 = vector.load %arg1[%c0_18, %c5, %c0_19, %c0_20] : memref<1x8x128x50xbf16, #tpu.memory_space<vmem>>, vector<1x1x128x50xbf16>
    %24 = vector.shape_cast %23 : vector<1x1x128x50xbf16> to vector<128x50xbf16>
    %25 = arith.extf %24 : vector<128x50xbf16> to vector<128x50xf32>
    %26 = arith.addf %22, %25 : vector<128x50xf32>
    %c0_21 = arith.constant 0 : index
    %c6 = arith.constant 6 : index
    %c0_22 = arith.constant 0 : index
    %c0_23 = arith.constant 0 : index
    %27 = vector.load %arg1[%c0_21, %c6, %c0_22, %c0_23] : memref<1x8x128x50xbf16, #tpu.memory_space<vmem>>, vector<1x1x128x50xbf16>
    %28 = vector.shape_cast %27 : vector<1x1x128x50xbf16> to vector<128x50xbf16>
    %29 = arith.extf %28 : vector<128x50xbf16> to vector<128x50xf32>
    %30 = arith.addf %26, %29 : vector<128x50xf32>
    %31 = arith.subf %30, %5 : vector<128x50xf32>
    %cst = arith.constant 0.142857149 : f32
    %32 = vector.broadcast %cst : f32 to vector<128x50xf32>
    %33 = arith.mulf %31, %32 : vector<128x50xf32>
    %34 = arith.subf %30, %2 : vector<128x50xf32>
    %cst_24 = arith.constant 0.142857149 : f32
    %35 = vector.broadcast %cst_24 : f32 to vector<128x50xf32>
    %36 = arith.mulf %34, %35 : vector<128x50xf32>
    %37 = arith.truncf %33 : vector<128x50xf32> to vector<128x50xbf16>
    %c0_25 = arith.constant 0 : index
    %c0_26 = arith.constant 0 : index
    %38 = vector.load %arg4[%c0_25, %c0_26] : memref<50x50xbf16, #tpu.memory_space<vmem>>, vector<50x50xbf16>
    %cst_27 = arith.constant dense<0.000000e+00> : vector<128x50xf32>
    %39 = tpu.matmul %37, %38, %cst_27 {dimension_numbers = #tpu.dot_dimension_numbers<[1], [0], [0], [1], [0, 0, 1, 1], [], []>} : vector<128x50xbf16>, vector<50x50xbf16>, vector<128x50xf32> -> vector<128x50xf32>
    %40 = arith.truncf %36 : vector<128x50xf32> to vector<128x50xbf16>
    %c0_28 = arith.constant 0 : index
    %c0_29 = arith.constant 0 : index
    %41 = vector.load %arg5[%c0_28, %c0_29] : memref<50x50xbf16, #tpu.memory_space<vmem>>, vector<50x50xbf16>
    %cst_30 = arith.constant dense<0.000000e+00> : vector<128x50xf32>
    %42 = tpu.matmul %40, %41, %cst_30 {dimension_numbers = #tpu.dot_dimension_numbers<[1], [0], [0], [1], [0, 0, 1, 1], [], []>} : vector<128x50xbf16>, vector<50x50xbf16>, vector<128x50xf32> -> vector<128x50xf32>
    %43 = arith.addf %39, %42 : vector<128x50xf32>
    %c0_31 = arith.constant 0 : index
    %c0_32 = arith.constant 0 : index
    %44 = vector.load %arg6[%c0_31, %c0_32] : memref<1x50xf32, #tpu.memory_space<vmem>>, vector<1x50xf32>
    %45 = vector.broadcast %44 : vector<1x50xf32> to vector<128x50xf32>
    %46 = arith.addf %43, %45 : vector<128x50xf32>
    %c0_33 = arith.constant 0 : index
    %c0_34 = arith.constant 0 : index
    %c0_35 = arith.constant 0 : index
    %47 = vector.load %arg2[%c0_33, %c0_34, %c0_35] : memref<1x128x1xi32, #tpu.memory_space<vmem>>, vector<1x128x1xi32>
    %48 = vector.shape_cast %47 : vector<1x128x1xi32> to vector<128x1xi32>
    %49 = tpu.iota {dimensions = array<i32: 1>} : vector<128x8xi32>
    %50 = vector.broadcast %48 : vector<128x1xi32> to vector<128x8xi32>
    %51 = arith.cmpi eq, %49, %50 : vector<128x8xi32>
    %52 = arith.extui %51 : vector<128x8xi1> to vector<128x8xi32>
    %53 = arith.sitofp %52 : vector<128x8xi32> to vector<128x8xf32>
    %c0_i32 = arith.constant 0 : i32
    %54 = vector.broadcast %c0_i32 : i32 to vector<128x1xi32>
    %55 = arith.cmpi sge, %48, %54 : vector<128x1xi32>
    %56 = arith.extui %55 : vector<128x1xi1> to vector<128x1xi32>
    %57 = arith.sitofp %56 : vector<128x1xi32> to vector<128x1xf32>
    %58 = vector.broadcast %57 : vector<128x1xf32> to vector<128x50xf32>
    %59 = arith.mulf %46, %58 : vector<128x50xf32>
    %60 = arith.truncf %59 : vector<128x50xf32> to vector<128x50xbf16>
    %c0_36 = arith.constant 0 : index
    %c0_37 = arith.constant 0 : index
    %61 = vector.load %arg7[%c0_36, %c0_37] : memref<50x32xbf16, #tpu.memory_space<vmem>>, vector<50x32xbf16>
    %cst_38 = arith.constant dense<0.000000e+00> : vector<128x32xf32>
    %62 = tpu.matmul %60, %61, %cst_38 {dimension_numbers = #tpu.dot_dimension_numbers<[1], [0], [0], [1], [0, 0, 1, 1], [], []>} : vector<128x50xbf16>, vector<50x32xbf16>, vector<128x32xf32> -> vector<128x32xf32>
    %63 = arith.truncf %53 : vector<128x8xf32> to vector<128x8xbf16>
    %c0_39 = arith.constant 0 : index
    %c0_40 = arith.constant 0 : index
    %64 = vector.load %arg8[%c0_39, %c0_40] : memref<8x32xbf16, #tpu.memory_space<vmem>>, vector<8x32xbf16>
    %cst_41 = arith.constant dense<0.000000e+00> : vector<128x32xf32>
    %65 = tpu.matmul %63, %64, %cst_41 {dimension_numbers = #tpu.dot_dimension_numbers<[1], [0], [0], [1], [0, 0, 1, 1], [], []>} : vector<128x8xbf16>, vector<8x32xbf16>, vector<128x32xf32> -> vector<128x32xf32>
    %66 = arith.addf %62, %65 : vector<128x32xf32>
    %c0_42 = arith.constant 0 : index
    %c0_43 = arith.constant 0 : index
    %c0_44 = arith.constant 0 : index
    %67 = vector.load %arg3[%c0_42, %c0_43, %c0_44] : memref<1x128x128xbf16, #tpu.memory_space<vmem>>, vector<1x128x128xbf16>
    %68 = vector.shape_cast %67 : vector<1x128x128xbf16> to vector<128x128xbf16>
    %69 = arith.truncf %66 : vector<128x32xf32> to vector<128x32xbf16>
    %cst_45 = arith.constant dense<0.000000e+00> : vector<128x32xf32>
    %70 = tpu.matmul %68, %69, %cst_45 {dimension_numbers = #tpu.dot_dimension_numbers<[1], [0], [0], [1], [0, 0, 1, 1], [], []>} : vector<128x128xbf16>, vector<128x32xbf16>, vector<128x32xf32> -> vector<128x32xf32>
    %c0_46 = arith.constant 0 : index
    %c0_47 = arith.constant 0 : index
    %71 = vector.load %arg9[%c0_46, %c0_47] : memref<1x32xf32, #tpu.memory_space<vmem>>, vector<1x32xf32>
    %72 = vector.broadcast %71 : vector<1x32xf32> to vector<128x32xf32>
    %73 = arith.addf %70, %72 : vector<128x32xf32>
    %74 = arith.mulf %73, %73 : vector<128x32xf32>
    %cst_48 = arith.constant dense<0.000000e+00> : vector<128xf32>
    %75 = vector.multi_reduction <add>, %74, %cst_48 [1] : vector<128x32xf32> to vector<128xf32>
    %76 = vector.shape_cast %75 : vector<128xf32> to vector<128x1xf32>
    %cst_49 = arith.constant 1.000000e-24 : f32
    %77 = vector.broadcast %cst_49 : f32 to vector<128x1xf32>
    %78 = arith.maximumf %76, %77 : vector<128x1xf32>
    %79 = math.rsqrt %78 : vector<128x1xf32>
    %80 = vector.broadcast %79 : vector<128x1xf32> to vector<128x32xf32>
    %81 = arith.mulf %73, %80 : vector<128x32xf32>
    %cst_50 = arith.constant 0.000000e+00 : f32
    %82 = vector.broadcast %cst_50 : f32 to vector<128x32xf32>
    %83 = arith.maximumf %81, %82 : vector<128x32xf32>
    %84 = vector.shape_cast %83 : vector<128x32xf32> to vector<8x16x32xf32>
    %cst_51 = arith.constant dense<0xFF800000> : vector<8x32xf32>
    %85 = vector.multi_reduction <maximumf>, %84, %cst_51 [1] : vector<8x16x32xf32> to vector<8x32xf32>
    %cst_52 = arith.constant dense<0.000000e+00> : vector<8x32xf32>
    %86 = vector.multi_reduction <add>, %84, %cst_52 [1] : vector<8x16x32xf32> to vector<8x32xf32>
    %cst_53 = arith.constant 1.600000e+01 : f32
    %87 = vector.broadcast %cst_53 : f32 to vector<8x32xf32>
    %88 = arith.divf %86, %87 : vector<8x32xf32>
    %89 = arith.truncf %85 : vector<8x32xf32> to vector<8x32xbf16>
    %c0_54 = arith.constant 0 : index
    %c0_55 = arith.constant 0 : index
    %90 = vector.load %arg10[%c0_54, %c0_55] : memref<32x4xbf16, #tpu.memory_space<vmem>>, vector<32x4xbf16>
    %cst_56 = arith.constant dense<0.000000e+00> : vector<8x4xf32>
    %91 = tpu.matmul %89, %90, %cst_56 {dimension_numbers = #tpu.dot_dimension_numbers<[1], [0], [0], [1], [0, 0, 1, 1], [], []>} : vector<8x32xbf16>, vector<32x4xbf16>, vector<8x4xf32> -> vector<8x4xf32>
    %92 = arith.truncf %88 : vector<8x32xf32> to vector<8x32xbf16>
    %c0_57 = arith.constant 0 : index
    %c0_58 = arith.constant 0 : index
    %93 = vector.load %arg11[%c0_57, %c0_58] : memref<32x4xbf16, #tpu.memory_space<vmem>>, vector<32x4xbf16>
    %cst_59 = arith.constant dense<0.000000e+00> : vector<8x4xf32>
    %94 = tpu.matmul %92, %93, %cst_59 {dimension_numbers = #tpu.dot_dimension_numbers<[1], [0], [0], [1], [0, 0, 1, 1], [], []>} : vector<8x32xbf16>, vector<32x4xbf16>, vector<8x4xf32> -> vector<8x4xf32>
    %95 = arith.addf %91, %94 : vector<8x4xf32>
    %c0_60 = arith.constant 0 : index
    %c0_61 = arith.constant 0 : index
    %96 = vector.load %arg12[%c0_60, %c0_61] : memref<1x4xf32, #tpu.memory_space<vmem>>, vector<1x4xf32>
    %97 = vector.broadcast %96 : vector<1x4xf32> to vector<8x4xf32>
    %98 = arith.addf %95, %97 : vector<8x4xf32>
    %99 = vector.shape_cast %98 : vector<8x4xf32> to vector<1x8x4xf32>
    %c0_62 = arith.constant 0 : index
    %c0_63 = arith.constant 0 : index
    %c0_64 = arith.constant 0 : index
    %100 = vector.load %arg13[%c0_62, %c0_63, %c0_64] : memref<1x8x4xf32, #tpu.memory_space<vmem>>, vector<1x8x4xf32>
    tpu.vector_store %arg13[%c0_62, %c0_63, %c0_64], %99 {strides = array<i32>} : memref<1x8x4xf32, #tpu.memory_space<vmem>>, vector<1x8x4xf32>,
    return
  }
  func.func @transform_0(%arg0: i32) -> (i32, i32, i32, i32) {
    %c0_i32 = arith.constant 0 : i32
    %c0_i32_0 = arith.constant 0 : i32
    %c0_i32_1 = arith.constant 0 : i32
    %c0_i32_2 = arith.constant 0 : i32
    return %arg0, %c0_i32, %c0_i32_0, %c0_i32_1 : i32, i32, i32, i32
  }
  func.func @transform_1(%arg0: i32) -> (i32, i32, i32) {
    %c0_i32 = arith.constant 0 : i32
    %c0_i32_0 = arith.constant 0 : i32
    %c0_i32_1 = arith.constant 0 : i32
    return %arg0, %c0_i32, %c0_i32_0 : i32, i32, i32
  }
  func.func @transform_2(%arg0: i32) -> (i32, i32, i32) {
    %c0_i32 = arith.constant 0 : i32
    %c0_i32_0 = arith.constant 0 : i32
    %c0_i32_1 = arith.constant 0 : i32
    return %arg0, %c0_i32, %c0_i32_0 : i32, i32, i32
  }
  func.func @transform_3(%arg0: i32) -> (i32, i32) {
    %c0_i32 = arith.constant 0 : i32
    %c0_i32_0 = arith.constant 0 : i32
    %c0_i32_1 = arith.constant 0 : i32
    return %c0_i32, %c0_i32_0 : i32, i32
  }
  func.func @transform_4(%arg0: i32) -> (i32, i32) {
    %c0_i32 = arith.constant 0 : i32
    %c0_i32_0 = arith.constant 0 : i32
    %c0_i32_1 = arith.constant 0 : i32
    return %c0_i32, %c0_i32_0 : i32, i32
  }
  func.func @transform_5(%arg0: i32) -> (i32, i32) {
    %c0_i32 = arith.constant 0 : i32
    %c0_i32_0 = arith.constant 0 : i32
    %c0_i32_1 = arith.constant 0 : i32
    return %c0_i32, %c0_i32_0 : i32, i32
  }
  func.func @transform_6(%arg0: i32) -> (i32, i32) {
    %c0_i32 = arith.constant 0 : i32
    %c0_i32_0 = arith.constant 0 : i32
    %c0_i32_1 = arith.constant 0 : i32
    return %c0_i32, %c0_i32_0 : i32, i32
  }
  func.func @transform_7(%arg0: i32) -> (i32, i32) {
    %c0_i32 = arith.constant 0 : i32
    %c0_i32_0 = arith.constant 0 : i32
    %c0_i32_1 = arith.constant 0 : i32
    return %c0_i32, %c0_i32_0 : i32, i32
  }
  func.func @transform_8(%arg0: i32) -> (i32, i32) {
    %c0_i32 = arith.constant 0 : i32
    %c0_i32_0 = arith.constant 0 : i32
    %c0_i32_1 = arith.constant 0 : i32
    return %c0_i32, %c0_i32_0 : i32, i32
  }
  func.func @transform_9(%arg0: i32) -> (i32, i32) {
    %c0_i32 = arith.constant 0 : i32
    %c0_i32_0 = arith.constant 0 : i32
    %c0_i32_1 = arith.constant 0 : i32
    return %c0_i32, %c0_i32_0 : i32, i32
  }
  func.func @transform_10(%arg0: i32) -> (i32, i32) {
    %c0_i32 = arith.constant 0 : i32
    %c0_i32_0 = arith.constant 0 : i32
    %c0_i32_1 = arith.constant 0 : i32
    return %c0_i32, %c0_i32_0 : i32, i32
  }
  func.func @transform_11(%arg0: i32) -> (i32, i32) {
    %c0_i32 = arith.constant 0 : i32
    %c0_i32_0 = arith.constant 0 : i32
    %c0_i32_1 = arith.constant 0 : i32
    return %c0_i32, %c0_i32_0 : i32, i32
  }
  func.func @transform_12(%arg0: i32) -> (i32, i32, i32) {
    %c0_i32 = arith.constant 0 : i32
    %c0_i32_0 = arith.constant 0 : i32
    %c0_i32_1 = arith.constant 0 : i32
    return %arg0, %c0_i32, %c0_i32_0 : i32, i32, i32
  }
}

</mosaic_0001>

<llo_original>
// kernel: tpu_custom_call.1
$region0: #{tpu_custom_call.1}
  #allocation0 [shape = 'u32[]', space=smem, size = 0x4, offset = 0x4, fixed_abs, tag = 'smem constant byte address 0x4 - core index']
  #allocation1 [shape = 'u32[72,128]{1,0:T(1,128)}', space=vmem, size = 0x9000, scoped, tag = 'internal scratch']
  %s0 = inlined_call_operand.vmem [shape: bf16[2,8,128,50], index: 0, kind: input, shape index: {}]
  %s1 = inlined_call_operand.vmem [shape: s32[2,128,1], index: 1, kind: input, shape index: {}]
  %s2 = inlined_call_operand.vmem [shape: bf16[2,128,128], index: 2, kind: input, shape index: {}]
  %s3 = inlined_call_operand.vmem [shape: bf16[50,50], index: 3, kind: input, shape index: {}]
  %s4 = inlined_call_operand.vmem [shape: bf16[50,50], index: 4, kind: input, shape index: {}]
  %s5 = inlined_call_operand.vmem [shape: f32[1,50], index: 5, kind: input, shape index: {}]
  %s6 = inlined_call_operand.vmem [shape: bf16[50,32], index: 6, kind: input, shape index: {}]
  %s7 = inlined_call_operand.vmem [shape: bf16[8,32], index: 7, kind: input, shape index: {}]
  %s8 = inlined_call_operand.vmem [shape: f32[1,32], index: 8, kind: input, shape index: {}]
  %s9 = inlined_call_operand.vmem [shape: bf16[32,4], index: 9, kind: input, shape index: {}]
  %s10 = inlined_call_operand.vmem [shape: bf16[32,4], index: 10, kind: input, shape index: {}]
  %s11 = inlined_call_operand.vmem [shape: f32[1,4], index: 11, kind: input, shape index: {}]
  %s12 = inlined_call_operand.vmem [shape: f32[2,8,4], index: 12, kind: output, shape index: {}]
  %s13 = sld [smem:[#allocation0]]
  $region81: #{tpu_custom_call.1} parent=0
    _
  %s15 = ssub.s32 1, %s13
  %s16 = scalar_select 0, %s15, %s13
  loop: start=0, step=1, limit=4
  $region2: #{tpu_custom_call.1} parent=0 // loop_pre_header
    _
  $region3: #{tpu_custom_call.1} parent=0 // loop_header
    %s18 = sphi 0, %s22
    %p19 = scmp.ge.s32.totalorder %s18, 4
    %s28 = sphi 0, %s30
    %s31 = sphi 0, %s28
    %s32 = sphi 0, %s31
    %s48 = sphi 0, %s32
    %s54 = sphi 0, %s56
    %s57 = sphi 0, %s54
    %s58 = sphi 0, %s57
    %s74 = sphi 0, %s58
    %s80 = sphi 0, %s82
    %s83 = sphi 0, %s80
    %s84 = sphi 0, %s83
    %s100 = sphi 0, %s84
    %s104 = sphi 0, %s104
    %s106 = sphi 0, %s104
    %s107 = sphi 0, %s106
    %s121 = sphi 0, %s107
    %s125 = sphi 0, %s125
    %s127 = sphi 0, %s125
    %s128 = sphi 0, %s127
    %s142 = sphi 0, %s128
    %s146 = sphi 0, %s146
    %s148 = sphi 0, %s146
    %s149 = sphi 0, %s148
    %s163 = sphi 0, %s149
    %s167 = sphi 0, %s167
    %s169 = sphi 0, %s167
    %s170 = sphi 0, %s169
    %s184 = sphi 0, %s170
    %s188 = sphi 0, %s188
    %s190 = sphi 0, %s188
    %s191 = sphi 0, %s190
    %s205 = sphi 0, %s191
    %s209 = sphi 0, %s209
    %s211 = sphi 0, %s209
    %s212 = sphi 0, %s211
    %s226 = sphi 0, %s212
    %s230 = sphi 0, %s230
    %s232 = sphi 0, %s230
    %s233 = sphi 0, %s232
    %s247 = sphi 0, %s233
    %s251 = sphi 0, %s251
    %s253 = sphi 0, %s251
    %s254 = sphi 0, %s253
    %s268 = sphi 0, %s254
    %s272 = sphi 0, %s272
    %s274 = sphi 0, %s272
    %s275 = sphi 0, %s274
    %s289 = sphi 0, %s275
    %s295 = sphi 0, %s297
    %s298 = sphi 0, %s295
    %s299 = sphi 0, %s298
    %s315 = sphi 0, %s299
  $region4: #{tpu_custom_call.1} parent=0 // loop_header_branch
    %21 = sbr.rel (%p19) target = $region8
  $region5: #{tpu_custom_call.1} parent=0 // loop_body
    %s23 = ssub.s32 %s18, 1
    %s24 = ssub.s32 %s18, 2
    %s25 = sadd.s32 %s18, 1
    %s26 = ssub.s32 %s18, %s25
    %p27 = scmp.eq.s32.totalorder %s26, 0
    %s29 = sadd.s32 %s28, 1
    %s30 = scalar_select %p27, %s28, %s29
    %p33 = pneg %p27
    %p34 = scmp.eq.s32.totalorder %s18, 1
    %p35 = por %p33, %p34
    %p36 = scmp.ne.s32.totalorder %s28, %s31
    %p37 = scmp.eq.s32.totalorder %s18, 0
    %p38 = por %p36, %p37
    %p39 = scmp.ne.s32.totalorder %s28, %s31
    %p40 = scmp.eq.s32.totalorder %s23, 1
    %p41 = por %p39, %p40
    %p42 = scmp.ne.s32.totalorder %s31, %s32
    %p43 = scmp.eq.s32.totalorder %s23, 0
    %p44 = por %p42, %p43
    %p45 = scmp.ne.s32.totalorder %s31, %s32
    %p46 = scmp.eq.s32.totalorder %s24, 1
    %p47 = por %p45, %p46
    %p49 = scmp.ne.s32.totalorder %s32, %s48
    %p50 = scmp.eq.s32.totalorder %s24, 0
    %p51 = por %p49, %p50
    %s52 = ssub.s32 %s18, %s25
    %p53 = scmp.eq.s32.totalorder %s52, 0
    %s55 = sadd.s32 %s54, 1
    %s56 = scalar_select %p53, %s54, %s55
    %p59 = pneg %p53
    %p60 = scmp.eq.s32.totalorder %s18, 1
    %p61 = por %p59, %p60
    %p62 = scmp.ne.s32.totalorder %s54, %s57
    %p63 = scmp.eq.s32.totalorder %s18, 0
    %p64 = por %p62, %p63
    %p65 = scmp.ne.s32.totalorder %s54, %s57
    %p66 = scmp.eq.s32.totalorder %s23, 1
    %p67 = por %p65, %p66
    %p68 = scmp.ne.s32.totalorder %s57, %s58
    %p69 = scmp.eq.s32.totalorder %s23, 0
    %p70 = por %p68, %p69
    %p71 = scmp.ne.s32.totalorder %s57, %s58
    %p72 = scmp.eq.s32.totalorder %s24, 1
    %p73 = por %p71, %p72
    %p75 = scmp.ne.s32.totalorder %s58, %s74
    %p76 = scmp.eq.s32.totalorder %s24, 0
    %p77 = por %p75, %p76
    %s78 = ssub.s32 %s18, %s25
    %p79 = scmp.eq.s32.totalorder %s78, 0
    %s81 = sadd.s32 %s80, 1
    %s82 = scalar_select %p79, %s80, %s81
    %p85 = pneg %p79
    %p86 = scmp.eq.s32.totalorder %s18, 1
    %p87 = por %p85, %p86
    %p88 = scmp.ne.s32.totalorder %s80, %s83
    %p89 = scmp.eq.s32.totalorder %s18, 0
    %p90 = por %p88, %p89
    %p91 = scmp.ne.s32.totalorder %s80, %s83
    %p92 = scmp.eq.s32.totalorder %s23, 1
    %p93 = por %p91, %p92
    %p94 = scmp.ne.s32.totalorder %s83, %s84
    %p95 = scmp.eq.s32.totalorder %s23, 0
    %p96 = por %p94, %p95
    %p97 = scmp.ne.s32.totalorder %s83, %s84
    %p98 = scmp.eq.s32.totalorder %s24, 1
    %p99 = por %p97, %p98
    %p101 = scmp.ne.s32.totalorder %s84, %s100
    %p102 = scmp.eq.s32.totalorder %s24, 0
    %p103 = por %p101, %p102
    %s105 = sadd.s32 %s104, 1
    %p108 = scmp.eq.s32.totalorder %s18, 1
    %p109 = scmp.ne.s32.totalorder %s104, %s106
    %p110 = scmp.eq.s32.totalorder %s18, 0
    %p111 = por %p109, %p110
    %p112 = scmp.ne.s32.totalorder %s104, %s106
    %p113 = scmp.eq.s32.totalorder %s23, 1
    %p114 = por %p112, %p113
    %p115 = scmp.ne.s32.totalorder %s106, %s107
    %p116 = scmp.eq.s32.totalorder %s23, 0
    %p117 = por %p115, %p116
    %p118 = scmp.ne.s32.totalorder %s106, %s107
    %p119 = scmp.eq.s32.totalorder %s24, 1
    %p120 = por %p118, %p119
    %p122 = scmp.ne.s32.totalorder %s107, %s121
    %p123 = scmp.eq.s32.totalorder %s24, 0
    %p124 = por %p122, %p123
    %s126 = sadd.s32 %s125, 1
    %p129 = scmp.eq.s32.totalorder %s18, 1
    %p130 = scmp.ne.s32.totalorder %s125, %s127
    %p131 = scmp.eq.s32.totalorder %s18, 0
    %p132 = por %p130, %p131
    %p133 = scmp.ne.s32.totalorder %s125, %s127
    %p134 = scmp.eq.s32.totalorder %s23, 1
    %p135 = por %p133, %p134
    %p136 = scmp.ne.s32.totalorder %s127, %s128
    %p137 = scmp.eq.s32.totalorder %s23, 0
    %p138 = por %p136, %p137
    %p139 = scmp.ne.s32.totalorder %s127, %s128
    %p140 = scmp.eq.s32.totalorder %s24, 1
    %p141 = por %p139, %p140
    %p143 = scmp.ne.s32.totalorder %s128, %s142
    %p144 = scmp.eq.s32.totalorder %s24, 0
    %p145 = por %p143, %p144
    %s147 = sadd.s32 %s146, 1
    %p150 = scmp.eq.s32.totalorder %s18, 1
    %p151 = scmp.ne.s32.totalorder %s146, %s148
    %p152 = scmp.eq.s32.totalorder %s18, 0
    %p153 = por %p151, %p152
    %p154 = scmp.ne.s32.totalorder %s146, %s148
    %p155 = scmp.eq.s32.totalorder %s23, 1
    %p156 = por %p154, %p155
    %p157 = scmp.ne.s32.totalorder %s148, %s149
    %p158 = scmp.eq.s32.totalorder %s23, 0
    %p159 = por %p157, %p158
    %p160 = scmp.ne.s32.totalorder %s148, %s149
    %p161 = scmp.eq.s32.totalorder %s24, 1
    %p162 = por %p160, %p161
    %p164 = scmp.ne.s32.totalorder %s149, %s163
    %p165 = scmp.eq.s32.totalorder %s24, 0
    %p166 = por %p164, %p165
    %s168 = sadd.s32 %s167, 1
    %p171 = scmp.eq.s32.totalorder %s18, 1
    %p172 = scmp.ne.s32.totalorder %s167, %s169
    %p173 = scmp.eq.s32.totalorder %s18, 0
    %p174 = por %p172, %p173
    %p175 = scmp.ne.s32.totalorder %s167, %s169
    %p176 = scmp.eq.s32.totalorder %s23, 1
    %p177 = por %p175, %p176
    %p178 = scmp.ne.s32.totalorder %s169, %s170
    %p179 = scmp.eq.s32.totalorder %s23, 0
    %p180 = por %p178, %p179
    %p181 = scmp.ne.s32.totalorder %s169, %s170
    %p182 = scmp.eq.s32.totalorder %s24, 1
    %p183 = por %p181, %p182
    %p185 = scmp.ne.s32.totalorder %s170, %s184
    %p186 = scmp.eq.s32.totalorder %s24, 0
    %p187 = por %p185, %p186
    %s189 = sadd.s32 %s188, 1
    %p192 = scmp.eq.s32.totalorder %s18, 1
    %p193 = scmp.ne.s32.totalorder %s188, %s190
    %p194 = scmp.eq.s32.totalorder %s18, 0
    %p195 = por %p193, %p194
    %p196 = scmp.ne.s32.totalorder %s188, %s190
    %p197 = scmp.eq.s32.totalorder %s23, 1
    %p198 = por %p196, %p197
    %p199 = scmp.ne.s32.totalorder %s190, %s191
    %p200 = scmp.eq.s32.totalorder %s23, 0
    %p201 = por %p199, %p200
    %p202 = scmp.ne.s32.totalorder %s190, %s191
    %p203 = scmp.eq.s32.totalorder %s24, 1
    %p204 = por %p202, %p203
    %p206 = scmp.ne.s32.totalorder %s191, %s205
    %p207 = scmp.eq.s32.totalorder %s24, 0
    %p208 = por %p206, %p207
    %s210 = sadd.s32 %s209, 1
    %p213 = scmp.eq.s32.totalorder %s18, 1
    %p214 = scmp.ne.s32.totalorder %s209, %s211
    %p215 = scmp.eq.s32.totalorder %s18, 0
    %p216 = por %p214, %p215
    %p217 = scmp.ne.s32.totalorder %s209, %s211
    %p218 = scmp.eq.s32.totalorder %s23, 1
    %p219 = por %p217, %p218
    %p220 = scmp.ne.s32.totalorder %s211, %s212
    %p221 = scmp.eq.s32.totalorder %s23, 0
    %p222 = por %p220, %p221
    %p223 = scmp.ne.s32.totalorder %s211, %s212
    %p224 = scmp.eq.s32.totalorder %s24, 1
    %p225 = por %p223, %p224
    %p227 = scmp.ne.s32.totalorder %s212, %s226
    %p228 = scmp.eq.s32.totalorder %s24, 0
    %p229 = por %p227, %p228
    %s231 = sadd.s32 %s230, 1
    %p234 = scmp.eq.s32.totalorder %s18, 1
    %p235 = scmp.ne.s32.totalorder %s230, %s232
    %p236 = scmp.eq.s32.totalorder %s18, 0
    %p237 = por %p235, %p236
    %p238 = scmp.ne.s32.totalorder %s230, %s232
    %p239 = scmp.eq.s32.totalorder %s23, 1
    %p240 = por %p238, %p239
    %p241 = scmp.ne.s32.totalorder %s232, %s233
    %p242 = scmp.eq.s32.totalorder %s23, 0
    %p243 = por %p241, %p242
    %p244 = scmp.ne.s32.totalorder %s232, %s233
    %p245 = scmp.eq.s32.totalorder %s24, 1
    %p246 = por %p244, %p245
    %p248 = scmp.ne.s32.totalorder %s233, %s247
    %p249 = scmp.eq.s32.totalorder %s24, 0
    %p250 = por %p248, %p249
    %s252 = sadd.s32 %s251, 1
    %p255 = scmp.eq.s32.totalorder %s18, 1
    %p256 = scmp.ne.s32.totalorder %s251, %s253
    %p257 = scmp.eq.s32.totalorder %s18, 0
    %p258 = por %p256, %p257
    %p259 = scmp.ne.s32.totalorder %s251, %s253
    %p260 = scmp.eq.s32.totalorder %s23, 1
    %p261 = por %p259, %p260
    %p262 = scmp.ne.s32.totalorder %s253, %s254
    %p263 = scmp.eq.s32.totalorder %s23, 0
    %p264 = por %p262, %p263
    %p265 = scmp.ne.s32.totalorder %s253, %s254
    %p266 = scmp.eq.s32.totalorder %s24, 1
    %p267 = por %p265, %p266
    %p269 = scmp.ne.s32.totalorder %s254, %s268
    %p270 = scmp.eq.s32.totalorder %s24, 0
    %p271 = por %p269, %p270
    %s273 = sadd.s32 %s272, 1
    %p276 = scmp.eq.s32.totalorder %s18, 1
    %p277 = scmp.ne.s32.totalorder %s272, %s274
    %p278 = scmp.eq.s32.totalorder %s18, 0
    %p279 = por %p277, %p278
    %p280 = scmp.ne.s32.totalorder %s272, %s274
    %p281 = scmp.eq.s32.totalorder %s23, 1
    %p282 = por %p280, %p281
    %p283 = scmp.ne.s32.totalorder %s274, %s275
    %p284 = scmp.eq.s32.totalorder %s23, 0
    %p285 = por %p283, %p284
    %p286 = scmp.ne.s32.totalorder %s274, %s275
    %p287 = scmp.eq.s32.totalorder %s24, 1
    %p288 = por %p286, %p287
    %p290 = scmp.ne.s32.totalorder %s275, %s289
    %p291 = scmp.eq.s32.totalorder %s24, 0
    %p292 = por %p290, %p291
    %s293 = ssub.s32 %s18, %s25
    %p294 = scmp.eq.s32.totalorder %s293, 0
    %s296 = sadd.s32 %s295, 1
    %s297 = scalar_select %p294, %s295, %s296
    %p300 = pneg %p294
    %p301 = scmp.eq.s32.totalorder %s18, 1
    %p302 = por %p300, %p301
    %p303 = scmp.ne.s32.totalorder %s295, %s298
    %p304 = scmp.eq.s32.totalorder %s18, 0
    %p305 = por %p303, %p304
    %p306 = scmp.ne.s32.totalorder %s295, %s298
    %p307 = scmp.eq.s32.totalorder %s23, 1
    %p308 = por %p306, %p307
    %p309 = scmp.ne.s32.totalorder %s298, %s299
    %p310 = scmp.eq.s32.totalorder %s23, 0
    %p311 = por %p309, %p310
    %p312 = scmp.ne.s32.totalorder %s298, %s299
    %p313 = scmp.eq.s32.totalorder %s24, 1
    %p314 = por %p312, %p313
    %p316 = scmp.ne.s32.totalorder %s299, %s315
    %p317 = scmp.eq.s32.totalorder %s24, 0
    %p318 = por %p316, %p317
    %p319 = scmp.le.s32.totalorder 1, %s18
    %p320 = scmp.lt.s32.totalorder %s18, 3
    %p321 = pnand %p319, %p320
    %p322 = pneg %p321
    // Predicated region
    $region9: #{tpu_custom_call.1} parent=5 // pred_check
      _
    $region10: #{tpu_custom_call.1} parent=5 // pred_check_branch
      %324 = sbr.rel (%p321) target = $region12
    $region11: #{tpu_custom_call.1} parent=5 // pred_region
      %s325 = ssub.s32 %s18, 1
      // Predicated region
      $region13: #{tpu_custom_call.1} parent=11 // pred_check
        %p326 = pneg %p117
      $region14: #{tpu_custom_call.1} parent=11 // pred_check_branch
        %328 = sbr.rel (%p326) target = $region16
      $region15: #{tpu_custom_call.1} parent=11 // pred_region
        _
      $region16: #{tpu_custom_call.1} parent=11 // pred_fallthru
        _
      // Predicated region
      $region17: #{tpu_custom_call.1} parent=11 // pred_check
        %p329 = pneg %p138
      $region18: #{tpu_custom_call.1} parent=11 // pred_check_branch
        %331 = sbr.rel (%p329) target = $region20
      $region19: #{tpu_custom_call.1} parent=11 // pred_region
        _
      $region20: #{tpu_custom_call.1} parent=11 // pred_fallthru
        _
      // Predicated region
      $region21: #{tpu_custom_call.1} parent=11 // pred_check
        %p332 = pneg %p159
      $region22: #{tpu_custom_call.1} parent=11 // pred_check_branch
        %334 = sbr.rel (%p332) target = $region24
      $region23: #{tpu_custom_call.1} parent=11 // pred_region
        _
      $region24: #{tpu_custom_call.1} parent=11 // pred_fallthru
        _
      // Predicated region
      $region25: #{tpu_custom_call.1} parent=11 // pred_check
        %p335 = pneg %p180
      $region26: #{tpu_custom_call.1} parent=11 // pred_check_branch
        %337 = sbr.rel (%p335) target = $region28
      $region27: #{tpu_custom_call.1} parent=11 // pred_region
        _
      $region28: #{tpu_custom_call.1} parent=11 // pred_fallthru
        _
      // Predicated region
      $region29: #{tpu_custom_call.1} parent=11 // pred_check
        %p338 = pneg %p201
      $region30: #{tpu_custom_call.1} parent=11 // pred_check_branch
        %340 = sbr.rel (%p338) target = $region32
      $region31: #{tpu_custom_call.1} parent=11 // pred_region
        _
      $region32: #{tpu_custom_call.1} parent=11 // pred_fallthru
        _
      // Predicated region
      $region33: #{tpu_custom_call.1} parent=11 // pred_check
        %p341 = pneg %p222
      $region34: #{tpu_custom_call.1} parent=11 // pred_check_branch
        %343 = sbr.rel (%p341) target = $region36
      $region35: #{tpu_custom_call.1} parent=11 // pred_region
        _
      $region36: #{tpu_custom_call.1} parent=11 // pred_fallthru
        _
      // Predicated region
      $region37: #{tpu_custom_call.1} parent=11 // pred_check
        %p344 = pneg %p243
      $region38: #{tpu_custom_call.1} parent=11 // pred_check_branch
        %346 = sbr.rel (%p344) target = $region40
      $region39: #{tpu_custom_call.1} parent=11 // pred_region
        _
      $region40: #{tpu_custom_call.1} parent=11 // pred_fallthru
        _
      // Predicated region
      $region41: #{tpu_custom_call.1} parent=11 // pred_check
        %p347 = pneg %p264
      $region42: #{tpu_custom_call.1} parent=11 // pred_check_branch
        %349 = sbr.rel (%p347) target = $region44
      $region43: #{tpu_custom_call.1} parent=11 // pred_region
        _
      $region44: #{tpu_custom_call.1} parent=11 // pred_fallthru
        _
      // Predicated region
      $region45: #{tpu_custom_call.1} parent=11 // pred_check
        %p350 = pneg %p285
      $region46: #{tpu_custom_call.1} parent=11 // pred_check_branch
        %352 = sbr.rel (%p350) target = $region48
      $region47: #{tpu_custom_call.1} parent=11 // pred_region
        _
      $region48: #{tpu_custom_call.1} parent=11 // pred_fallthru
        _
    $region12: #{tpu_custom_call.1} parent=5 // pred_fallthru
      _
    %p353 = scmp.lt.s32.totalorder %s18, 2
    // Predicated region
    $region49: #{tpu_custom_call.1} parent=5 // pred_check
      %p354 = pneg %p353
    $region50: #{tpu_custom_call.1} parent=5 // pred_check_branch
      %356 = sbr.rel (%p354) target = $region52
    $region51: #{tpu_custom_call.1} parent=5 // pred_region
      // Predicated region
      $region53: #{tpu_custom_call.1} parent=51 // pred_check
        %p357 = pneg %p38
      $region54: #{tpu_custom_call.1} parent=51 // pred_check_branch
        %359 = sbr.rel (%p357) target = $region56
      $region55: #{tpu_custom_call.1} parent=51 // pred_region
        %p360 = scmp.lt.s32.totalorder %s18, 1
        %s361 = scalar_select %p360, %s18, 1
        %s362 = smul.addr %s361, 128
        %s363 = smul.addr %s362, 4
        %s364 = scalar_lea.vmem %s0, %s363
      $region56: #{tpu_custom_call.1} parent=51 // pred_fallthru
        _
      // Predicated region
      $region57: #{tpu_custom_call.1} parent=51 // pred_check
        %p365 = pneg %p64
      $region58: #{tpu_custom_call.1} parent=51 // pred_check_branch
        %367 = sbr.rel (%p365) target = $region60
      $region59: #{tpu_custom_call.1} parent=51 // pred_region
        %p368 = scmp.lt.s32.totalorder %s18, 1
        %s369 = scalar_select %p368, %s18, 1
        %s370 = smul.addr %s369, 16
        %s371 = smul.addr %s370, 8
        %s372 = scalar_lea.vmem %s1, %s371
      $region60: #{tpu_custom_call.1} parent=51 // pred_fallthru
        _
      // Predicated region
      $region61: #{tpu_custom_call.1} parent=51 // pred_check
        %p373 = pneg %p90
      $region62: #{tpu_custom_call.1} parent=51 // pred_check_branch
        %375 = sbr.rel (%p373) target = $region64
      $region63: #{tpu_custom_call.1} parent=51 // pred_region
        %p376 = scmp.lt.s32.totalorder %s18, 1
        %s377 = scalar_select %p376, %s18, 1
        %s378 = smul.addr %s377, 16
        %s379 = smul.addr %s378, 4
        %s380 = scalar_lea.vmem %s2, %s379
      $region64: #{tpu_custom_call.1} parent=51 // pred_fallthru
        _
    $region52: #{tpu_custom_call.1} parent=5 // pred_fallthru
      _
    %p381 = scmp.le.s32.totalorder 1, %s18
    %p382 = scmp.lt.s32.totalorder %s18, 3
    %p383 = pnand %p381, %p382
    %p384 = pneg %p383
    // Predicated region
    $region65: #{tpu_custom_call.1} parent=5 // pred_check
      _
    $region66: #{tpu_custom_call.1} parent=5 // pred_check_branch
      %386 = sbr.rel (%p383) target = $region68
    $region67: #{tpu_custom_call.1} parent=5 // pred_region
      %s387 = ssub.s32 %s18, 1
      %p388 = scmp.lt.s32.totalorder %s23, 1
      %s389 = scalar_select %p388, %s23, 1
      %s390 = smul.addr %s389, 128
      %s391 = smul.addr %s390, 4
      %s392 = scalar_lea.vmem %s0, %s391
      %p393 = pneg %p44
      %p394 = pneg %p41
      %p395 = scmp.lt.s32.totalorder %s23, 1
      %s396 = scalar_select %p395, %s23, 1
      %s397 = smul.addr %s396, 16
      %s398 = smul.addr %s397, 8
      %s399 = scalar_lea.vmem %s1, %s398
      %p400 = pneg %p70
      %p401 = pneg %p67
      %p402 = scmp.lt.s32.totalorder %s23, 1
      %s403 = scalar_select %p402, %s23, 1
      %s404 = smul.addr %s403, 16
      %s405 = smul.addr %s404, 4
      %s406 = scalar_lea.vmem %s2, %s405
      %p407 = pneg %p96
      %p408 = pneg %p93
      %p409 = pneg %p117
      %p410 = pneg %p114
      %p411 = pneg %p138
      %p412 = pneg %p135
      %p413 = pneg %p159
      %p414 = pneg %p156
      %p415 = pneg %p180
      %p416 = pneg %p177
      %p417 = pneg %p201
      %p418 = pneg %p198
      %p419 = pneg %p222
      %p420 = pneg %p219
      %p421 = pneg %p243
      %p422 = pneg %p240
      %p423 = pneg %p264
      %p424 = pneg %p261
      %p425 = pneg %p285
      %p426 = pneg %p282
      %p427 = pneg %p311
      %p428 = pneg %p308
      %p429 = scmp.lt.s32.totalorder %s23, 1
      %s430 = scalar_select %p429, %s23, 1
      %s431 = smul.addr %s430, 8
      %s432 = scalar_lea.vmem %s12, %s431
      %p433 = scmp.lt.s32.totalorder %s23, 1
      %s434 = scalar_select %p433, %s23, 1
      %s435 = smul.addr %s434, 128
      %s436 = smul.addr %s435, 4
      %s437 = scalar_lea.vmem %s0, %s436
      %p438 = scmp.lt.s32.totalorder %s23, 1
      %s439 = scalar_select %p438, %s23, 1
      %s440 = smul.addr %s439, 16
      %s441 = smul.addr %s440, 8
      %s442 = scalar_lea.vmem %s1, %s441
      %p443 = scmp.lt.s32.totalorder %s23, 1
      %s444 = scalar_select %p443, %s23, 1
      %s445 = smul.addr %s444, 16
      %s446 = smul.addr %s445, 4
      %s447 = scalar_lea.vmem %s2, %s446
      %p448 = scmp.lt.s32.totalorder %s23, 1
      %s449 = scalar_select %p448, %s23, 1
      %s450 = smul.addr %s449, 8
      %s451 = scalar_lea.vmem %s12, %s450
      %v453 = vld [vmem:[%s437] sm:$0xf]
      %v454 = vld [vmem:[%s437 + $0x4] sm:$0xf]
      %v455 = vld [vmem:[%s437 + $0x8] sm:$0xf]
      %v456 = vld [vmem:[%s437 + $0xc] sm:$0xf]
      %v457 = vld [vmem:[%s437 + $0x10] sm:$0xf]
      %v458 = vld [vmem:[%s437 + $0x14] sm:$0xf]
      %v459 = vld [vmem:[%s437 + $0x18] sm:$0xf]
      %v460 = vld [vmem:[%s437 + $0x1c] sm:$0xf]
      %v461 = vld [vmem:[%s437 + $0x20] sm:$0xf]
      %v462 = vld [vmem:[%s437 + $0x24] sm:$0xf]
      %v463 = vld [vmem:[%s437 + $0x28] sm:$0xf]
      %v464 = vld [vmem:[%s437 + $0x2c] sm:$0xf]
      %v465 = vld [vmem:[%s437 + $0x30] sm:$0xf]
      %v466 = vld [vmem:[%s437 + $0x34] sm:$0xf]
      %v467 = vld [vmem:[%s437 + $0x38] sm:$0xf]
      %v468 = vld [vmem:[%s437 + $0x3c] sm:$0xf]
      %v469 = vunpack.c.l.bf16 %v453
      %v470 = vunpack.c.l.bf16 %v454
      %v471 = vunpack.c.l.bf16 %v455
      %v472 = vunpack.c.l.bf16 %v456
      %v473 = vunpack.c.l.bf16 %v457
      %v474 = vunpack.c.l.bf16 %v458
      %v475 = vunpack.c.l.bf16 %v459
      %v476 = vunpack.c.l.bf16 %v460
      %v477 = vunpack.c.l.bf16 %v461
      %v478 = vunpack.c.l.bf16 %v462
      %v479 = vunpack.c.l.bf16 %v463
      %v480 = vunpack.c.l.bf16 %v464
      %v481 = vunpack.c.l.bf16 %v465
      %v482 = vunpack.c.l.bf16 %v466
      %v483 = vunpack.c.l.bf16 %v467
      %v484 = vunpack.c.l.bf16 %v468
      %s485 = scalar_lea.vmem %s437, 448
      %v486 = vld [vmem:[%s485] sm:$0xf]
      %v487 = vld [vmem:[%s485 + $0x4] sm:$0xf]
      %v488 = vld [vmem:[%s485 + $0x8] sm:$0xf]
      %v489 = vld [vmem:[%s485 + $0xc] sm:$0xf]
      %v490 = vld [vmem:[%s485 + $0x10] sm:$0xf]
      %v491 = vld [vmem:[%s485 + $0x14] sm:$0xf]
      %v492 = vld [vmem:[%s485 + $0x18] sm:$0xf]
      %v493 = vld [vmem:[%s485 + $0x1c] sm:$0xf]
      %v494 = vld [vmem:[%s485 + $0x20] sm:$0xf]
      %v495 = vld [vmem:[%s485 + $0x24] sm:$0xf]
      %v496 = vld [vmem:[%s485 + $0x28] sm:$0xf]
      %v497 = vld [vmem:[%s485 + $0x2c] sm:$0xf]
      %v498 = vld [vmem:[%s485 + $0x30] sm:$0xf]
      %v499 = vld [vmem:[%s485 + $0x34] sm:$0xf]
      %v500 = vld [vmem:[%s485 + $0x38] sm:$0xf]
      %v501 = vld [vmem:[%s485 + $0x3c] sm:$0xf]
      %v502 = vunpack.c.l.bf16 %v486
      %v503 = vunpack.c.l.bf16 %v487
      %v504 = vunpack.c.l.bf16 %v488
      %v505 = vunpack.c.l.bf16 %v489
      %v506 = vunpack.c.l.bf16 %v490
      %v507 = vunpack.c.l.bf16 %v491
      %v508 = vunpack.c.l.bf16 %v492
      %v509 = vunpack.c.l.bf16 %v493
      %v510 = vunpack.c.l.bf16 %v494
      %v511 = vunpack.c.l.bf16 %v495
      %v512 = vunpack.c.l.bf16 %v496
      %v513 = vunpack.c.l.bf16 %v497
      %v514 = vunpack.c.l.bf16 %v498
      %v515 = vunpack.c.l.bf16 %v499
      %v516 = vunpack.c.l.bf16 %v500
      %v517 = vunpack.c.l.bf16 %v501
      %v518 = vadd.f32 %v469, %v502
      %v519 = vadd.f32 %v470, %v503
      %v520 = vadd.f32 %v471, %v504
      %v521 = vadd.f32 %v472, %v505
      %v522 = vadd.f32 %v473, %v506
      %v523 = vadd.f32 %v474, %v507
      %v524 = vadd.f32 %v475, %v508
      %v525 = vadd.f32 %v476, %v509
      %v526 = vadd.f32 %v477, %v510
      %v527 = vadd.f32 %v478, %v511
      %v528 = vadd.f32 %v479, %v512
      %v529 = vadd.f32 %v480, %v513
      %v530 = vadd.f32 %v481, %v514
      %v531 = vadd.f32 %v482, %v515
      %v532 = vadd.f32 %v483, %v516
      %v533 = vadd.f32 %v484, %v517
      %s534 = scalar_lea.vmem %s437, 64
      %v535 = vld [vmem:[%s534] sm:$0xf]
      %v536 = vld [vmem:[%s534 + $0x4] sm:$0xf]
      %v537 = vld [vmem:[%s534 + $0x8] sm:$0xf]
      %v538 = vld [vmem:[%s534 + $0xc] sm:$0xf]
      %v539 = vld [vmem:[%s534 + $0x10] sm:$0xf]
      %v540 = vld [vmem:[%s534 + $0x14] sm:$0xf]
      %v541 = vld [vmem:[%s534 + $0x18] sm:$0xf]
      %v542 = vld [vmem:[%s534 + $0x1c] sm:$0xf]
      %v543 = vld [vmem:[%s534 + $0x20] sm:$0xf]
      %v544 = vld [vmem:[%s534 + $0x24] sm:$0xf]
      %v545 = vld [vmem:[%s534 + $0x28] sm:$0xf]
      %v546 = vld [vmem:[%s534 + $0x2c] sm:$0xf]
      %v547 = vld [vmem:[%s534 + $0x30] sm:$0xf]
      %v548 = vld [vmem:[%s534 + $0x34] sm:$0xf]
      %v549 = vld [vmem:[%s534 + $0x38] sm:$0xf]
      %v550 = vld [vmem:[%s534 + $0x3c] sm:$0xf]
      %v551 = vunpack.c.l.bf16 %v535
      %v552 = vunpack.c.l.bf16 %v536
      %v553 = vunpack.c.l.bf16 %v537
      %v554 = vunpack.c.l.bf16 %v538
      %v555 = vunpack.c.l.bf16 %v539
      %v556 = vunpack.c.l.bf16 %v540
      %v557 = vunpack.c.l.bf16 %v541
      %v558 = vunpack.c.l.bf16 %v542
      %v559 = vunpack.c.l.bf16 %v543
      %v560 = vunpack.c.l.bf16 %v544
      %v561 = vunpack.c.l.bf16 %v545
      %v562 = vunpack.c.l.bf16 %v546
      %v563 = vunpack.c.l.bf16 %v547
      %v564 = vunpack.c.l.bf16 %v548
      %v565 = vunpack.c.l.bf16 %v549
      %v566 = vunpack.c.l.bf16 %v550
      %v567 = vadd.f32 %v518, %v551
      %v568 = vadd.f32 %v519, %v552
      %v569 = vadd.f32 %v520, %v553
      %v570 = vadd.f32 %v521, %v554
      %v571 = vadd.f32 %v522, %v555
      %v572 = vadd.f32 %v523, %v556
      %v573 = vadd.f32 %v524, %v557
      %v574 = vadd.f32 %v525, %v558
      %v575 = vadd.f32 %v526, %v559
      %v576 = vadd.f32 %v527, %v560
      %v577 = vadd.f32 %v528, %v561
      %v578 = vadd.f32 %v529, %v562
      %v579 = vadd.f32 %v530, %v563
      %v580 = vadd.f32 %v531, %v564
      %v581 = vadd.f32 %v532, %v565
      %v582 = vadd.f32 %v533, %v566
      %s583 = scalar_lea.vmem %s437, 128
      %v584 = vld [vmem:[%s583] sm:$0xf]
      %v585 = vld [vmem:[%s583 + $0x4] sm:$0xf]
      %v586 = vld [vmem:[%s583 + $0x8] sm:$0xf]
      %v587 = vld [vmem:[%s583 + $0xc] sm:$0xf]
      %v588 = vld [vmem:[%s583 + $0x10] sm:$0xf]
      %v589 = vld [vmem:[%s583 + $0x14] sm:$0xf]
      %v590 = vld [vmem:[%s583 + $0x18] sm:$0xf]
      %v591 = vld [vmem:[%s583 + $0x1c] sm:$0xf]
      %v592 = vld [vmem:[%s583 + $0x20] sm:$0xf]
      %v593 = vld [vmem:[%s583 + $0x24] sm:$0xf]
      %v594 = vld [vmem:[%s583 + $0x28] sm:$0xf]
      %v595 = vld [vmem:[%s583 + $0x2c] sm:$0xf]
      %v596 = vld [vmem:[%s583 + $0x30] sm:$0xf]
      %v597 = vld [vmem:[%s583 + $0x34] sm:$0xf]
      %v598 = vld [vmem:[%s583 + $0x38] sm:$0xf]
      %v599 = vld [vmem:[%s583 + $0x3c] sm:$0xf]
      %v600 = vunpack.c.l.bf16 %v584
      %v601 = vunpack.c.l.bf16 %v585
      %v602 = vunpack.c.l.bf16 %v586
      %v603 = vunpack.c.l.bf16 %v587
      %v604 = vunpack.c.l.bf16 %v588
      %v605 = vunpack.c.l.bf16 %v589
      %v606 = vunpack.c.l.bf16 %v590
      %v607 = vunpack.c.l.bf16 %v591
      %v608 = vunpack.c.l.bf16 %v592
      %v609 = vunpack.c.l.bf16 %v593
      %v610 = vunpack.c.l.bf16 %v594
      %v611 = vunpack.c.l.bf16 %v595
      %v612 = vunpack.c.l.bf16 %v596
      %v613 = vunpack.c.l.bf16 %v597
      %v614 = vunpack.c.l.bf16 %v598
      %v615 = vunpack.c.l.bf16 %v599
      %v616 = vadd.f32 %v567, %v600
      %v617 = vadd.f32 %v568, %v601
      %v618 = vadd.f32 %v569, %v602
      %v619 = vadd.f32 %v570, %v603
      %v620 = vadd.f32 %v571, %v604
      %v621 = vadd.f32 %v572, %v605
      %v622 = vadd.f32 %v573, %v606
      %v623 = vadd.f32 %v574, %v607
      %v624 = vadd.f32 %v575, %v608
      %v625 = vadd.f32 %v576, %v609
      %v626 = vadd.f32 %v577, %v610
      %v627 = vadd.f32 %v578, %v611
      %v628 = vadd.f32 %v579, %v612
      %v629 = vadd.f32 %v580, %v613
      %v630 = vadd.f32 %v581, %v614
      %v631 = vadd.f32 %v582, %v615
      %s632 = scalar_lea.vmem %s437, 192
      %v633 = vld [vmem:[%s632] sm:$0xf]
      %v634 = vld [vmem:[%s632 + $0x4] sm:$0xf]
      %v635 = vld [vmem:[%s632 + $0x8] sm:$0xf]
      %v636 = vld [vmem:[%s632 + $0xc] sm:$0xf]
      %v637 = vld [vmem:[%s632 + $0x10] sm:$0xf]
      %v638 = vld [vmem:[%s632 + $0x14] sm:$0xf]
      %v639 = vld [vmem:[%s632 + $0x18] sm:$0xf]
      %v640 = vld [vmem:[%s632 + $0x1c] sm:$0xf]
      %v641 = vld [vmem:[%s632 + $0x20] sm:$0xf]
      %v642 = vld [vmem:[%s632 + $0x24] sm:$0xf]
      %v643 = vld [vmem:[%s632 + $0x28] sm:$0xf]
      %v644 = vld [vmem:[%s632 + $0x2c] sm:$0xf]
      %v645 = vld [vmem:[%s632 + $0x30] sm:$0xf]
      %v646 = vld [vmem:[%s632 + $0x34] sm:$0xf]
      %v647 = vld [vmem:[%s632 + $0x38] sm:$0xf]
      %v648 = vld [vmem:[%s632 + $0x3c] sm:$0xf]
      %v649 = vunpack.c.l.bf16 %v633
      %v650 = vunpack.c.l.bf16 %v634
      %v651 = vunpack.c.l.bf16 %v635
      %v652 = vunpack.c.l.bf16 %v636
      %v653 = vunpack.c.l.bf16 %v637
      %v654 = vunpack.c.l.bf16 %v638
      %v655 = vunpack.c.l.bf16 %v639
      %v656 = vunpack.c.l.bf16 %v640
      %v657 = vunpack.c.l.bf16 %v641
      %v658 = vunpack.c.l.bf16 %v642
      %v659 = vunpack.c.l.bf16 %v643
      %v660 = vunpack.c.l.bf16 %v644
      %v661 = vunpack.c.l.bf16 %v645
      %v662 = vunpack.c.l.bf16 %v646
      %v663 = vunpack.c.l.bf16 %v647
      %v664 = vunpack.c.l.bf16 %v648
      %v665 = vadd.f32 %v616, %v649
      %v666 = vadd.f32 %v617, %v650
      %v667 = vadd.f32 %v618, %v651
      %v668 = vadd.f32 %v619, %v652
      %v669 = vadd.f32 %v620, %v653
      %v670 = vadd.f32 %v621, %v654
      %v671 = vadd.f32 %v622, %v655
      %v672 = vadd.f32 %v623, %v656
      %v673 = vadd.f32 %v624, %v657
      %v674 = vadd.f32 %v625, %v658
      %v675 = vadd.f32 %v626, %v659
      %v676 = vadd.f32 %v627, %v660
      %v677 = vadd.f32 %v628, %v661
      %v678 = vadd.f32 %v629, %v662
      %v679 = vadd.f32 %v630, %v663
      %v680 = vadd.f32 %v631, %v664
      %s681 = scalar_lea.vmem %s437, 256
      %v682 = vld [vmem:[%s681] sm:$0xf]
      %v683 = vld [vmem:[%s681 + $0x4] sm:$0xf]
      %v684 = vld [vmem:[%s681 + $0x8] sm:$0xf]
      %v685 = vld [vmem:[%s681 + $0xc] sm:$0xf]
      %v686 = vld [vmem:[%s681 + $0x10] sm:$0xf]
      %v687 = vld [vmem:[%s681 + $0x14] sm:$0xf]
      %v688 = vld [vmem:[%s681 + $0x18] sm:$0xf]
      %v689 = vld [vmem:[%s681 + $0x1c] sm:$0xf]
      %v690 = vld [vmem:[%s681 + $0x20] sm:$0xf]
      %v691 = vld [vmem:[%s681 + $0x24] sm:$0xf]
      %v692 = vld [vmem:[%s681 + $0x28] sm:$0xf]
      %v693 = vld [vmem:[%s681 + $0x2c] sm:$0xf]
      %v694 = vld [vmem:[%s681 + $0x30] sm:$0xf]
      %v695 = vld [vmem:[%s681 + $0x34] sm:$0xf]
      %v696 = vld [vmem:[%s681 + $0x38] sm:$0xf]
      %v697 = vld [vmem:[%s681 + $0x3c] sm:$0xf]
      %v698 = vunpack.c.l.bf16 %v682
      %v699 = vunpack.c.l.bf16 %v683
      %v700 = vunpack.c.l.bf16 %v684
      %v701 = vunpack.c.l.bf16 %v685
      %v702 = vunpack.c.l.bf16 %v686
      %v703 = vunpack.c.l.bf16 %v687
      %v704 = vunpack.c.l.bf16 %v688
      %v705 = vunpack.c.l.bf16 %v689
      %v706 = vunpack.c.l.bf16 %v690
      %v707 = vunpack.c.l.bf16 %v691
      %v708 = vunpack.c.l.bf16 %v692
      %v709 = vunpack.c.l.bf16 %v693
      %v710 = vunpack.c.l.bf16 %v694
      %v711 = vunpack.c.l.bf16 %v695
      %v712 = vunpack.c.l.bf16 %v696
      %v713 = vunpack.c.l.bf16 %v697
      %v714 = vadd.f32 %v665, %v698
      %v715 = vadd.f32 %v666, %v699
      %v716 = vadd.f32 %v667, %v700
      %v717 = vadd.f32 %v668, %v701
      %v718 = vadd.f32 %v669, %v702
      %v719 = vadd.f32 %v670, %v703
      %v720 = vadd.f32 %v671, %v704
      %v721 = vadd.f32 %v672, %v705
      %v722 = vadd.f32 %v673, %v706
      %v723 = vadd.f32 %v674, %v707
      %v724 = vadd.f32 %v675, %v708
      %v725 = vadd.f32 %v676, %v709
      %v726 = vadd.f32 %v677, %v710
      %v727 = vadd.f32 %v678, %v711
      %v728 = vadd.f32 %v679, %v712
      %v729 = vadd.f32 %v680, %v713
      %s730 = scalar_lea.vmem %s437, 320
      %v731 = vld [vmem:[%s730] sm:$0xf]
      %v732 = vld [vmem:[%s730 + $0x4] sm:$0xf]
      %v733 = vld [vmem:[%s730 + $0x8] sm:$0xf]
      %v734 = vld [vmem:[%s730 + $0xc] sm:$0xf]
      %v735 = vld [vmem:[%s730 + $0x10] sm:$0xf]
      %v736 = vld [vmem:[%s730 + $0x14] sm:$0xf]
      %v737 = vld [vmem:[%s730 + $0x18] sm:$0xf]
      %v738 = vld [vmem:[%s730 + $0x1c] sm:$0xf]
      %v739 = vld [vmem:[%s730 + $0x20] sm:$0xf]
      %v740 = vld [vmem:[%s730 + $0x24] sm:$0xf]
      %v741 = vld [vmem:[%s730 + $0x28] sm:$0xf]
      %v742 = vld [vmem:[%s730 + $0x2c] sm:$0xf]
      %v743 = vld [vmem:[%s730 + $0x30] sm:$0xf]
      %v744 = vld [vmem:[%s730 + $0x34] sm:$0xf]
      %v745 = vld [vmem:[%s730 + $0x38] sm:$0xf]
      %v746 = vld [vmem:[%s730 + $0x3c] sm:$0xf]
      %v747 = vunpack.c.l.bf16 %v731
      %v748 = vunpack.c.l.bf16 %v732
      %v749 = vunpack.c.l.bf16 %v733
      %v750 = vunpack.c.l.bf16 %v734
      %v751 = vunpack.c.l.bf16 %v735
      %v752 = vunpack.c.l.bf16 %v736
      %v753 = vunpack.c.l.bf16 %v737
      %v754 = vunpack.c.l.bf16 %v738
      %v755 = vunpack.c.l.bf16 %v739
      %v756 = vunpack.c.l.bf16 %v740
      %v757 = vunpack.c.l.bf16 %v741
      %v758 = vunpack.c.l.bf16 %v742
      %v759 = vunpack.c.l.bf16 %v743
      %v760 = vunpack.c.l.bf16 %v744
      %v761 = vunpack.c.l.bf16 %v745
      %v762 = vunpack.c.l.bf16 %v746
      %v763 = vadd.f32 %v714, %v747
      %v764 = vadd.f32 %v715, %v748
      %v765 = vadd.f32 %v716, %v749
      %v766 = vadd.f32 %v717, %v750
      %v767 = vadd.f32 %v718, %v751
      %v768 = vadd.f32 %v719, %v752
      %v769 = vadd.f32 %v720, %v753
      %v770 = vadd.f32 %v721, %v754
      %v771 = vadd.f32 %v722, %v755
      %v772 = vadd.f32 %v723, %v756
      %v773 = vadd.f32 %v724, %v757
      %v774 = vadd.f32 %v725, %v758
      %v775 = vadd.f32 %v726, %v759
      %v776 = vadd.f32 %v727, %v760
      %v777 = vadd.f32 %v728, %v761
      %v778 = vadd.f32 %v729, %v762
      %s779 = scalar_lea.vmem %s437, 384
      %v780 = vld [vmem:[%s779] sm:$0xf]
      %v781 = vld [vmem:[%s779 + $0x4] sm:$0xf]
      %v782 = vld [vmem:[%s779 + $0x8] sm:$0xf]
      %v783 = vld [vmem:[%s779 + $0xc] sm:$0xf]
      %v784 = vld [vmem:[%s779 + $0x10] sm:$0xf]
      %v785 = vld [vmem:[%s779 + $0x14] sm:$0xf]
      %v786 = vld [vmem:[%s779 + $0x18] sm:$0xf]
      %v787 = vld [vmem:[%s779 + $0x1c] sm:$0xf]
      %v788 = vld [vmem:[%s779 + $0x20] sm:$0xf]
      %v789 = vld [vmem:[%s779 + $0x24] sm:$0xf]
      %v790 = vld [vmem:[%s779 + $0x28] sm:$0xf]
      %v791 = vld [vmem:[%s779 + $0x2c] sm:$0xf]
      %v792 = vld [vmem:[%s779 + $0x30] sm:$0xf]
      %v793 = vld [vmem:[%s779 + $0x34] sm:$0xf]
      %v794 = vld [vmem:[%s779 + $0x38] sm:$0xf]
      %v795 = vld [vmem:[%s779 + $0x3c] sm:$0xf]
      %v796 = vunpack.c.l.bf16 %v780
      %v797 = vunpack.c.l.bf16 %v781
      %v798 = vunpack.c.l.bf16 %v782
      %v799 = vunpack.c.l.bf16 %v783
      %v800 = vunpack.c.l.bf16 %v784
      %v801 = vunpack.c.l.bf16 %v785
      %v802 = vunpack.c.l.bf16 %v786
      %v803 = vunpack.c.l.bf16 %v787
      %v804 = vunpack.c.l.bf16 %v788
      %v805 = vunpack.c.l.bf16 %v789
      %v806 = vunpack.c.l.bf16 %v790
      %v807 = vunpack.c.l.bf16 %v791
      %v808 = vunpack.c.l.bf16 %v792
      %v809 = vunpack.c.l.bf16 %v793
      %v810 = vunpack.c.l.bf16 %v794
      %v811 = vunpack.c.l.bf16 %v795
      %v812 = vadd.f32 %v763, %v796
      %v813 = vadd.f32 %v764, %v797
      %v814 = vadd.f32 %v765, %v798
      %v815 = vadd.f32 %v766, %v799
      %v816 = vadd.f32 %v767, %v800
      %v817 = vadd.f32 %v768, %v801
      %v818 = vadd.f32 %v769, %v802
      %v819 = vadd.f32 %v770, %v803
      %v820 = vadd.f32 %v771, %v804
      %v821 = vadd.f32 %v772, %v805
      %v822 = vadd.f32 %v773, %v806
      %v823 = vadd.f32 %v774, %v807
      %v824 = vadd.f32 %v775, %v808
      %v825 = vadd.f32 %v776, %v809
      %v826 = vadd.f32 %v777, %v810
      %v827 = vadd.f32 %v778, %v811
      %v828 = vsub.f32 %v812, %v502
      %v829 = vsub.f32 %v813, %v503
      %v830 = vsub.f32 %v814, %v504
      %v831 = vsub.f32 %v815, %v505
      %v832 = vsub.f32 %v816, %v506
      %v833 = vsub.f32 %v817, %v507
      %v834 = vsub.f32 %v818, %v508
      %v835 = vsub.f32 %v819, %v509
      %v836 = vsub.f32 %v820, %v510
      %v837 = vsub.f32 %v821, %v511
      %v838 = vsub.f32 %v822, %v512
      %v839 = vsub.f32 %v823, %v513
      %v840 = vsub.f32 %v824, %v514
      %v841 = vsub.f32 %v825, %v515
      %v842 = vsub.f32 %v826, %v516
      %v843 = vsub.f32 %v827, %v517
      %v844 = vmul.f32 %v828, 0.14285715
      %v845 = vmul.f32 %v829, 0.14285715
      %v846 = vmul.f32 %v830, 0.14285715
      %v847 = vmul.f32 %v831, 0.14285715
      %v848 = vmul.f32 %v832, 0.14285715
      %v849 = vmul.f32 %v833, 0.14285715
      %v850 = vmul.f32 %v834, 0.14285715
      %v851 = vmul.f32 %v835, 0.14285715
      %v852 = vmul.f32 %v836, 0.14285715
      %v853 = vmul.f32 %v837, 0.14285715
      %v854 = vmul.f32 %v838, 0.14285715
      %v855 = vmul.f32 %v839, 0.14285715
      %v856 = vmul.f32 %v840, 0.14285715
      %v857 = vmul.f32 %v841, 0.14285715
      %v858 = vmul.f32 %v842, 0.14285715
      %v859 = vmul.f32 %v843, 0.14285715
      %v860 = vsub.f32 %v812, %v469
      %v861 = vsub.f32 %v813, %v470
      %v862 = vsub.f32 %v814, %v471
      %v863 = vsub.f32 %v815, %v472
      %v864 = vsub.f32 %v816, %v473
      %v865 = vsub.f32 %v817, %v474
      %v866 = vsub.f32 %v818, %v475
      %v867 = vsub.f32 %v819, %v476
      %v868 = vsub.f32 %v820, %v477
      %v869 = vsub.f32 %v821, %v478
      %v870 = vsub.f32 %v822, %v479
      %v871 = vsub.f32 %v823, %v480
      %v872 = vsub.f32 %v824, %v481
      %v873 = vsub.f32 %v825, %v482
      %v874 = vsub.f32 %v826, %v483
      %v875 = vsub.f32 %v827, %v484
      %v876 = vmul.f32 %v860, 0.14285715
      %v877 = vmul.f32 %v861, 0.14285715
      %v878 = vmul.f32 %v862, 0.14285715
      %v879 = vmul.f32 %v863, 0.14285715
      %v880 = vmul.f32 %v864, 0.14285715
      %v881 = vmul.f32 %v865, 0.14285715
      %v882 = vmul.f32 %v866, 0.14285715
      %v883 = vmul.f32 %v867, 0.14285715
      %v884 = vmul.f32 %v868, 0.14285715
      %v885 = vmul.f32 %v869, 0.14285715
      %v886 = vmul.f32 %v870, 0.14285715
      %v887 = vmul.f32 %v871, 0.14285715
      %v888 = vmul.f32 %v872, 0.14285715
      %v889 = vmul.f32 %v873, 0.14285715
      %v890 = vmul.f32 %v874, 0.14285715
      %v891 = vmul.f32 %v875, 0.14285715
      %v892 = vpack.c.bf16 %v845, %v844
      %v893 = vpack.c.bf16 %v847, %v846
      %v894 = vpack.c.bf16 %v849, %v848
      %v895 = vpack.c.bf16 %v851, %v850
      %v896 = vpack.c.bf16 %v853, %v852
      %v897 = vpack.c.bf16 %v855, %v854
      %v898 = vpack.c.bf16 %v857, %v856
      %v899 = vpack.c.bf16 %v859, %v858
      %v900 = vld [vmem:[%s3] sm:$0xf]
      %v901 = vld [vmem:[%s3 + $0x4] sm:$0xf]
      %v902 = vld [vmem:[%s3 + $0x8] sm:$0xf]
      %v903 = vld [vmem:[%s3 + $0xc] sm:$0xf]
      %v904 = vld [vmem:[%s3 + $0x10] sm:$0xf]
      %v905 = vld [vmem:[%s3 + $0x14] sm:$0xf]
      %v906 = vld [vmem:[%s3 + $0x18] sm:$0x1]
      %v907 = vpack.c.bf16 %v877, %v876
      %v908 = vpack.c.bf16 %v879, %v878
      %v909 = vpack.c.bf16 %v881, %v880
      %v910 = vpack.c.bf16 %v883, %v882
      %v911 = vpack.c.bf16 %v885, %v884
      %v912 = vpack.c.bf16 %v887, %v886
      %v913 = vpack.c.bf16 %v889, %v888
      %v914 = vpack.c.bf16 %v891, %v890
      %v915 = vld [vmem:[%s4] sm:$0xf]
      %v916 = vld [vmem:[%s4 + $0x4] sm:$0xf]
      %v917 = vld [vmem:[%s4 + $0x8] sm:$0xf]
      %v918 = vld [vmem:[%s4 + $0xc] sm:$0xf]
      %v919 = vld [vmem:[%s4 + $0x10] sm:$0xf]
      %v920 = vld [vmem:[%s4 + $0x14] sm:$0xf]
      %v921 = vld [vmem:[%s4 + $0x18] sm:$0x1]
      %v929 = vunpack.c.l.b16 %v915
      %v930 = vunpack.c.l.b16 %v916
      %v931 = vunpack.c.l.b16 %v917
      %v932 = vunpack.c.l.b16 %v918
      %v933 = vunpack.c.l.b16 %v919
      %v934 = vunpack.c.l.b16 %v920
      %v935 = vunpack.c.l.b16 %v921
      %v936 = vpack.c.b16 %v930, %v929
      %v937 = vpack.c.b16 %v932, %v931
      %v938 = vpack.c.b16 %v934, %v933
      %v939 = vpack.c.b16 %v935, %v935
      %vm943 = vcmask 408576
      %v945 = vsel %vm943, %v907, 0
      %v948 = vsel %vm943, %v908, 0
      %v951 = vsel %vm943, %v909, 0
      %v954 = vsel %vm943, %v910, 0
      %v957 = vsel %vm943, %v911, 0
      %v960 = vsel %vm943, %v912, 0
      %v963 = vsel %vm943, %v913, 0
      %v966 = vsel %vm943, %v914, 0
      %vm968 = vcmask 1040384
      %v970 = vsel %vm968, %v939, 0
      %972 = vmatpush.bf16.msra.mxu0 0
      %973 = vmatpush.bf16.msra.mxu0 0
      %974 = vmatpush.bf16.msra.mxu0 0
      %975 = vmatpush.bf16.msra.mxu0 0
      %976 = vmatpush.bf16.msra.mxu0 %v970
      %977 = vmatpush.bf16.msra.mxu0 %v938
      %978 = vmatpush.bf16.msra.mxu0 %v937
      %979 = vmatpush.bf16.msra.mxu0 %v936
      %980 = vmatmul.bf16.gmra.mxu0 %v945
      %v981 = vpop.f32.mrf.mxu0
      %v982 = vadd.f32 0.0, %v981
      %v983 = vpop.f32.mrf.mxu0
      %v984 = vadd.f32 0.0, %v983
      %985 = vmatmul.bf16.gmra.mxu0 %v948
      %v986 = vpop.f32.mrf.mxu0
      %v987 = vadd.f32 0.0, %v986
      %v988 = vpop.f32.mrf.mxu0
      %v989 = vadd.f32 0.0, %v988
      %990 = vmatmul.bf16.gmra.mxu0 %v951
      %v991 = vpop.f32.mrf.mxu0
      %v992 = vadd.f32 0.0, %v991
      %v993 = vpop.f32.mrf.mxu0
      %v994 = vadd.f32 0.0, %v993
      %995 = vmatmul.bf16.gmra.mxu0 %v954
      %v996 = vpop.f32.mrf.mxu0
      %v997 = vadd.f32 0.0, %v996
      %v998 = vpop.f32.mrf.mxu0
      %v999 = vadd.f32 0.0, %v998
      %1000 = vmatmul.bf16.gmra.mxu0 %v957
      %v1001 = vpop.f32.mrf.mxu0
      %v1002 = vadd.f32 0.0, %v1001
      %v1003 = vpop.f32.mrf.mxu0
      %v1004 = vadd.f32 0.0, %v1003
      %1005 = vmatmul.bf16.gmra.mxu0 %v960
      %v1006 = vpop.f32.mrf.mxu0
      %v1007 = vadd.f32 0.0, %v1006
      %v1008 = vpop.f32.mrf.mxu0
      %v1009 = vadd.f32 0.0, %v1008
      %1010 = vmatmul.bf16.gmra.mxu0 %v963
      %v1011 = vpop.f32.mrf.mxu0
      %v1012 = vadd.f32 0.0, %v1011
      %v1013 = vpop.f32.mrf.mxu0
      %v1014 = vadd.f32 0.0, %v1013
      %1015 = vmatmul.bf16.gmra.mxu0 %v966
      %v1016 = vpop.f32.mrf.mxu0
      %v1017 = vadd.f32 0.0, %v1016
      %v1018 = vpop.f32.mrf.mxu0
      %v1019 = vadd.f32 0.0, %v1018
      %1020 = vdwg.mxu0
      %v1028 = vunpack.c.l.b16 %v900
      %v1029 = vunpack.c.l.b16 %v901
      %v1030 = vunpack.c.l.b16 %v902
      %v1031 = vunpack.c.l.b16 %v903
      %v1032 = vunpack.c.l.b16 %v904
      %v1033 = vunpack.c.l.b16 %v905
      %v1034 = vunpack.c.l.b16 %v906
      %v1035 = vpack.c.b16 %v1029, %v1028
      %v1036 = vpack.c.b16 %v1031, %v1030
      %v1037 = vpack.c.b16 %v1033, %v1032
      %v1038 = vpack.c.b16 %v1034, %v1034
      %v1043 = vsel %vm943, %v892, 0
      %v1046 = vsel %vm943, %v893, 0
      %v1049 = vsel %vm943, %v894, 0
      %v1052 = vsel %vm943, %v895, 0
      %v1055 = vsel %vm943, %v896, 0
      %v1058 = vsel %vm943, %v897, 0
      %v1061 = vsel %vm943, %v898, 0
      %v1064 = vsel %vm943, %v899, 0
      %v1067 = vsel %vm968, %v1038, 0
      %1069 = vmatpush.bf16.msra.mxu0 0
      %1070 = vmatpush.bf16.msra.mxu0 0
      %1071 = vmatpush.bf16.msra.mxu0 0
      %1072 = vmatpush.bf16.msra.mxu0 0
      %1073 = vmatpush.bf16.msra.mxu0 %v1067
      %1074 = vmatpush.bf16.msra.mxu0 %v1037
      %1075 = vmatpush.bf16.msra.mxu0 %v1036
      %1076 = vmatpush.bf16.msra.mxu0 %v1035
      %1077 = vmatmul.bf16.gmra.mxu0 %v1043
      %v1078 = vpop.f32.mrf.mxu0
      %v1079 = vadd.f32 %v982, %v1078
      %v1080 = vpop.f32.mrf.mxu0
      %v1081 = vadd.f32 %v984, %v1080
      %1082 = vmatmul.bf16.gmra.mxu0 %v1046
      %v1083 = vpop.f32.mrf.mxu0
      %v1084 = vadd.f32 %v987, %v1083
      %v1085 = vpop.f32.mrf.mxu0
      %v1086 = vadd.f32 %v989, %v1085
      %1087 = vmatmul.bf16.gmra.mxu0 %v1049
      %v1088 = vpop.f32.mrf.mxu0
      %v1089 = vadd.f32 %v992, %v1088
      %v1090 = vpop.f32.mrf.mxu0
      %v1091 = vadd.f32 %v994, %v1090
      %1092 = vmatmul.bf16.gmra.mxu0 %v1052
      %v1093 = vpop.f32.mrf.mxu0
      %v1094 = vadd.f32 %v997, %v1093
      %v1095 = vpop.f32.mrf.mxu0
      %v1096 = vadd.f32 %v999, %v1095
      %1097 = vmatmul.bf16.gmra.mxu0 %v1055
      %v1098 = vpop.f32.mrf.mxu0
      %v1099 = vadd.f32 %v1002, %v1098
      %v1100 = vpop.f32.mrf.mxu0
      %v1101 = vadd.f32 %v1004, %v1100
      %1102 = vmatmul.bf16.gmra.mxu0 %v1058
      %v1103 = vpop.f32.mrf.mxu0
      %v1104 = vadd.f32 %v1007, %v1103
      %v1105 = vpop.f32.mrf.mxu0
      %v1106 = vadd.f32 %v1009, %v1105
      %1107 = vmatmul.bf16.gmra.mxu0 %v1061
      %v1108 = vpop.f32.mrf.mxu0
      %v1109 = vadd.f32 %v1012, %v1108
      %v1110 = vpop.f32.mrf.mxu0
      %v1111 = vadd.f32 %v1014, %v1110
      %1112 = vmatmul.bf16.gmra.mxu0 %v1064
      %v1113 = vpop.f32.mrf.mxu0
      %v1114 = vadd.f32 %v1017, %v1113
      %v1115 = vpop.f32.mrf.mxu0
      %v1116 = vadd.f32 %v1019, %v1115
      %1117 = vdwg.mxu0
      %v1118 = vld [vmem:[%s5] sm:$0x1]
      %v1120 = vperm.slane %v1118, 0
      %v1122 = vadd.f32 %v1079, %v1120
      %v1123 = vadd.f32 %v1081, %v1120
      %v1124 = vadd.f32 %v1084, %v1120
      %v1125 = vadd.f32 %v1086, %v1120
      %v1126 = vadd.f32 %v1089, %v1120
      %v1127 = vadd.f32 %v1091, %v1120
      %v1128 = vadd.f32 %v1094, %v1120
      %v1129 = vadd.f32 %v1096, %v1120
      %v1130 = vadd.f32 %v1099, %v1120
      %v1131 = vadd.f32 %v1101, %v1120
      %v1132 = vadd.f32 %v1104, %v1120
      %v1133 = vadd.f32 %v1106, %v1120
      %v1134 = vadd.f32 %v1109, %v1120
      %v1135 = vadd.f32 %v1111, %v1120
      %v1136 = vadd.f32 %v1114, %v1120
      %v1137 = vadd.f32 %v1116, %v1120
      %v1138 = vld [vmem:[%s442] sm:$0xff]
      %v1139 = vld [vmem:[%s442 + $0x8] sm:$0xff]
      %v1140 = vld [vmem:[%s442 + $0x10] sm:$0xff]
      %v1141 = vld [vmem:[%s442 + $0x18] sm:$0xff]
      %v1142 = vld [vmem:[%s442 + $0x20] sm:$0xff]
      %v1143 = vld [vmem:[%s442 + $0x28] sm:$0xff]
      %v1144 = vld [vmem:[%s442 + $0x30] sm:$0xff]
      %v1145 = vld [vmem:[%s442 + $0x38] sm:$0xff]
      %v1146 = vld [vmem:[%s442 + $0x40] sm:$0xff]
      %v1147 = vld [vmem:[%s442 + $0x48] sm:$0xff]
      %v1148 = vld [vmem:[%s442 + $0x50] sm:$0xff]
      %v1149 = vld [vmem:[%s442 + $0x58] sm:$0xff]
      %v1150 = vld [vmem:[%s442 + $0x60] sm:$0xff]
      %v1151 = vld [vmem:[%s442 + $0x68] sm:$0xff]
      %v1152 = vld [vmem:[%s442 + $0x70] sm:$0xff]
      %v1153 = vld [vmem:[%s442 + $0x78] sm:$0xff]
      %v1154 = vlaneseq
      %v1155 = vand.u32 %v1154, 127
      %1156 = vset.pattern.permute.xlu0 0
      %1157 = vperm.xlu0 %1156, %v1138
      %v1158 = vpop.permute.xlu0 %1157
      %1159 = vset.pattern.permute.xlu0 0
      %1160 = vperm.xlu0 %1159, %v1139
      %v1161 = vpop.permute.xlu0 %1160
      %1162 = vset.pattern.permute.xlu0 0
      %1163 = vperm.xlu0 %1162, %v1140
      %v1164 = vpop.permute.xlu0 %1163
      %1165 = vset.pattern.permute.xlu0 0
      %1166 = vperm.xlu0 %1165, %v1141
      %v1167 = vpop.permute.xlu0 %1166
      %1168 = vset.pattern.permute.xlu0 0
      %1169 = vperm.xlu0 %1168, %v1142
      %v1170 = vpop.permute.xlu0 %1169
      %1171 = vset.pattern.permute.xlu0 0
      %1172 = vperm.xlu0 %1171, %v1143
      %v1173 = vpop.permute.xlu0 %1172
      %1174 = vset.pattern.permute.xlu0 0
      %1175 = vperm.xlu0 %1174, %v1144
      %v1176 = vpop.permute.xlu0 %1175
      %1177 = vset.pattern.permute.xlu0 0
      %1178 = vperm.xlu0 %1177, %v1145
      %v1179 = vpop.permute.xlu0 %1178
      %1180 = vset.pattern.permute.xlu0 0
      %1181 = vperm.xlu0 %1180, %v1146
      %v1182 = vpop.permute.xlu0 %1181
      %1183 = vset.pattern.permute.xlu0 0
      %1184 = vperm.xlu0 %1183, %v1147
      %v1185 = vpop.permute.xlu0 %1184
      %1186 = vset.pattern.permute.xlu0 0
      %1187 = vperm.xlu0 %1186, %v1148
      %v1188 = vpop.permute.xlu0 %1187
      %1189 = vset.pattern.permute.xlu0 0
      %1190 = vperm.xlu0 %1189, %v1149
      %v1191 = vpop.permute.xlu0 %1190
      %1192 = vset.pattern.permute.xlu0 0
      %1193 = vperm.xlu0 %1192, %v1150
      %v1194 = vpop.permute.xlu0 %1193
      %1195 = vset.pattern.permute.xlu0 0
      %1196 = vperm.xlu0 %1195, %v1151
      %v1197 = vpop.permute.xlu0 %1196
      %1198 = vset.pattern.permute.xlu0 0
      %1199 = vperm.xlu0 %1198, %v1152
      %v1200 = vpop.permute.xlu0 %1199
      %1201 = vset.pattern.permute.xlu0 0
      %1202 = vperm.xlu0 %1201, %v1153
      %v1203 = vpop.permute.xlu0 %1202
      %vm1204 = vcmp.eq.s32.totalorder %v1155, %v1158
      %vm1205 = vcmp.eq.s32.totalorder %v1155, %v1161
      %vm1206 = vcmp.eq.s32.totalorder %v1155, %v1164
      %vm1207 = vcmp.eq.s32.totalorder %v1155, %v1167
      %vm1208 = vcmp.eq.s32.totalorder %v1155, %v1170
      %vm1209 = vcmp.eq.s32.totalorder %v1155, %v1173
      %vm1210 = vcmp.eq.s32.totalorder %v1155, %v1176
      %vm1211 = vcmp.eq.s32.totalorder %v1155, %v1179
      %vm1212 = vcmp.eq.s32.totalorder %v1155, %v1182
      %vm1213 = vcmp.eq.s32.totalorder %v1155, %v1185
      %vm1214 = vcmp.eq.s32.totalorder %v1155, %v1188
      %vm1215 = vcmp.eq.s32.totalorder %v1155, %v1191
      %vm1216 = vcmp.eq.s32.totalorder %v1155, %v1194
      %vm1217 = vcmp.eq.s32.totalorder %v1155, %v1197
      %vm1218 = vcmp.eq.s32.totalorder %v1155, %v1200
      %vm1219 = vcmp.eq.s32.totalorder %v1155, %v1203
      %vm1220 = vcmp.ge.s32.totalorder %v1138, 0
      %vm1221 = vcmp.ge.s32.totalorder %v1139, 0
      %vm1222 = vcmp.ge.s32.totalorder %v1140, 0
      %vm1223 = vcmp.ge.s32.totalorder %v1141, 0
      %vm1224 = vcmp.ge.s32.totalorder %v1142, 0
      %vm1225 = vcmp.ge.s32.totalorder %v1143, 0
      %vm1226 = vcmp.ge.s32.totalorder %v1144, 0
      %vm1227 = vcmp.ge.s32.totalorder %v1145, 0
      %vm1228 = vcmp.ge.s32.totalorder %v1146, 0
      %vm1229 = vcmp.ge.s32.totalorder %v1147, 0
      %vm1230 = vcmp.ge.s32.totalorder %v1148, 0
      %vm1231 = vcmp.ge.s32.totalorder %v1149, 0
      %vm1232 = vcmp.ge.s32.totalorder %v1150, 0
      %vm1233 = vcmp.ge.s32.totalorder %v1151, 0
      %vm1234 = vcmp.ge.s32.totalorder %v1152, 0
      %vm1235 = vcmp.ge.s32.totalorder %v1153, 0
      %v1236 = vsel %vm1220, 1, 0
      %v1237 = vsel %vm1221, 1, 0
      %v1238 = vsel %vm1222, 1, 0
      %v1239 = vsel %vm1223, 1, 0
      %v1240 = vsel %vm1224, 1, 0
      %v1241 = vsel %vm1225, 1, 0
      %v1242 = vsel %vm1226, 1, 0
      %v1243 = vsel %vm1227, 1, 0
      %v1244 = vsel %vm1228, 1, 0
      %v1245 = vsel %vm1229, 1, 0
      %v1246 = vsel %vm1230, 1, 0
      %v1247 = vsel %vm1231, 1, 0
      %v1248 = vsel %vm1232, 1, 0
      %v1249 = vsel %vm1233, 1, 0
      %v1250 = vsel %vm1234, 1, 0
      %v1251 = vsel %vm1235, 1, 0
      %v1252 = vcvt.s32.f32 %v1236
      %v1253 = vcvt.s32.f32 %v1237
      %v1254 = vcvt.s32.f32 %v1238
      %v1255 = vcvt.s32.f32 %v1239
      %v1256 = vcvt.s32.f32 %v1240
      %v1257 = vcvt.s32.f32 %v1241
      %v1258 = vcvt.s32.f32 %v1242
      %v1259 = vcvt.s32.f32 %v1243
      %v1260 = vcvt.s32.f32 %v1244
      %v1261 = vcvt.s32.f32 %v1245
      %v1262 = vcvt.s32.f32 %v1246
      %v1263 = vcvt.s32.f32 %v1247
      %v1264 = vcvt.s32.f32 %v1248
      %v1265 = vcvt.s32.f32 %v1249
      %v1266 = vcvt.s32.f32 %v1250
      %v1267 = vcvt.s32.f32 %v1251
      %1269 = vset.pattern.permute.xlu0 0
      %1270 = vperm.xlu0 %1269, %v1252
      %v1271 = vpop.permute.xlu0 %1270
      %1274 = vset.pattern.permute.xlu0 0
      %1275 = vperm.xlu0 %1274, %v1253
      %v1276 = vpop.permute.xlu0 %1275
      %1279 = vset.pattern.permute.xlu0 0
      %1280 = vperm.xlu0 %1279, %v1254
      %v1281 = vpop.permute.xlu0 %1280
      %1284 = vset.pattern.permute.xlu0 0
      %1285 = vperm.xlu0 %1284, %v1255
      %v1286 = vpop.permute.xlu0 %1285
      %1289 = vset.pattern.permute.xlu0 0
      %1290 = vperm.xlu0 %1289, %v1256
      %v1291 = vpop.permute.xlu0 %1290
      %1294 = vset.pattern.permute.xlu0 0
      %1295 = vperm.xlu0 %1294, %v1257
      %v1296 = vpop.permute.xlu0 %1295
      %1299 = vset.pattern.permute.xlu0 0
      %1300 = vperm.xlu0 %1299, %v1258
      %v1301 = vpop.permute.xlu0 %1300
      %1304 = vset.pattern.permute.xlu0 0
      %1305 = vperm.xlu0 %1304, %v1259
      %v1306 = vpop.permute.xlu0 %1305
      %1309 = vset.pattern.permute.xlu0 0
      %1310 = vperm.xlu0 %1309, %v1260
      %v1311 = vpop.permute.xlu0 %1310
      %1314 = vset.pattern.permute.xlu0 0
      %1315 = vperm.xlu0 %1314, %v1261
      %v1316 = vpop.permute.xlu0 %1315
      %1319 = vset.pattern.permute.xlu0 0
      %1320 = vperm.xlu0 %1319, %v1262
      %v1321 = vpop.permute.xlu0 %1320
      %1324 = vset.pattern.permute.xlu0 0
      %1325 = vperm.xlu0 %1324, %v1263
      %v1326 = vpop.permute.xlu0 %1325
      %1329 = vset.pattern.permute.xlu0 0
      %1330 = vperm.xlu0 %1329, %v1264
      %v1331 = vpop.permute.xlu0 %1330
      %1334 = vset.pattern.permute.xlu0 0
      %1335 = vperm.xlu0 %1334, %v1265
      %v1336 = vpop.permute.xlu0 %1335
      %1339 = vset.pattern.permute.xlu0 0
      %1340 = vperm.xlu0 %1339, %v1266
      %v1341 = vpop.permute.xlu0 %1340
      %1344 = vset.pattern.permute.xlu0 0
      %1345 = vperm.xlu0 %1344, %v1267
      %v1346 = vpop.permute.xlu0 %1345
      %v1348 = vmul.f32 %v1122, %v1271
      %v1349 = vmul.f32 %v1123, %v1276
      %v1350 = vmul.f32 %v1124, %v1281
      %v1351 = vmul.f32 %v1125, %v1286
      %v1352 = vmul.f32 %v1126, %v1291
      %v1353 = vmul.f32 %v1127, %v1296
      %v1354 = vmul.f32 %v1128, %v1301
      %v1355 = vmul.f32 %v1129, %v1306
      %v1356 = vmul.f32 %v1130, %v1311
      %v1357 = vmul.f32 %v1131, %v1316
      %v1358 = vmul.f32 %v1132, %v1321
      %v1359 = vmul.f32 %v1133, %v1326
      %v1360 = vmul.f32 %v1134, %v1331
      %v1361 = vmul.f32 %v1135, %v1336
      %v1362 = vmul.f32 %v1136, %v1341
      %v1363 = vmul.f32 %v1137, %v1346
      %v1364 = vpack.c.bf16 %v1349, %v1348
      %v1365 = vpack.c.bf16 %v1351, %v1350
      %v1366 = vpack.c.bf16 %v1353, %v1352
      %v1367 = vpack.c.bf16 %v1355, %v1354
      %v1368 = vpack.c.bf16 %v1357, %v1356
      %v1369 = vpack.c.bf16 %v1359, %v1358
      %v1370 = vpack.c.bf16 %v1361, %v1360
      %v1371 = vpack.c.bf16 %v1363, %v1362
      %v1372 = vld [vmem:[%s6] sm:$0xf]
      %v1373 = vld [vmem:[%s6 + $0x4] sm:$0xf]
      %v1374 = vld [vmem:[%s6 + $0x8] sm:$0xf]
      %v1375 = vld [vmem:[%s6 + $0xc] sm:$0xf]
      %v1376 = vld [vmem:[%s6 + $0x10] sm:$0xf]
      %v1377 = vld [vmem:[%s6 + $0x14] sm:$0xf]
      %v1378 = vld [vmem:[%s6 + $0x18] sm:$0x1]
      %v1379 = vsel %vm1204, 1, 0
      %v1380 = vsel %vm1205, 1, 0
      %v1381 = vsel %vm1206, 1, 0
      %v1382 = vsel %vm1207, 1, 0
      %v1383 = vsel %vm1208, 1, 0
      %v1384 = vsel %vm1209, 1, 0
      %v1385 = vsel %vm1210, 1, 0
      %v1386 = vsel %vm1211, 1, 0
      %v1387 = vsel %vm1212, 1, 0
      %v1388 = vsel %vm1213, 1, 0
      %v1389 = vsel %vm1214, 1, 0
      %v1390 = vsel %vm1215, 1, 0
      %v1391 = vsel %vm1216, 1, 0
      %v1392 = vsel %vm1217, 1, 0
      %v1393 = vsel %vm1218, 1, 0
      %v1394 = vsel %vm1219, 1, 0
      %v1395 = vcvt.s32.f32 %v1379
      %v1396 = vcvt.s32.f32 %v1380
      %v1397 = vcvt.s32.f32 %v1381
      %v1398 = vcvt.s32.f32 %v1382
      %v1399 = vcvt.s32.f32 %v1383
      %v1400 = vcvt.s32.f32 %v1384
      %v1401 = vcvt.s32.f32 %v1385
      %v1402 = vcvt.s32.f32 %v1386
      %v1403 = vcvt.s32.f32 %v1387
      %v1404 = vcvt.s32.f32 %v1388
      %v1405 = vcvt.s32.f32 %v1389
      %v1406 = vcvt.s32.f32 %v1390
      %v1407 = vcvt.s32.f32 %v1391
      %v1408 = vcvt.s32.f32 %v1392
      %v1409 = vcvt.s32.f32 %v1393
      %v1410 = vcvt.s32.f32 %v1394
      %v1411 = vpack.c.bf16 %v1396, %v1395
      %v1412 = vpack.c.bf16 %v1398, %v1397
      %v1413 = vpack.c.bf16 %v1400, %v1399
      %v1414 = vpack.c.bf16 %v1402, %v1401
      %v1415 = vpack.c.bf16 %v1404, %v1403
      %v1416 = vpack.c.bf16 %v1406, %v1405
      %v1417 = vpack.c.bf16 %v1408, %v1407
      %v1418 = vpack.c.bf16 %v1410, %v1409
      %v1419 = vld [vmem:[%s7] sm:$0xf]
      %vm1420 = vcmask 64512
      %v1422 = vsel %vm1420, %v1411, 0
      %v1425 = vsel %vm1420, %v1412, 0
      %v1428 = vsel %vm1420, %v1413, 0
      %v1431 = vsel %vm1420, %v1414, 0
      %v1434 = vsel %vm1420, %v1415, 0
      %v1437 = vsel %vm1420, %v1416, 0
      %v1440 = vsel %vm1420, %v1417, 0
      %v1443 = vsel %vm1420, %v1418, 0
      %vm1445 = vcmask 1043456
      %v1447 = vsel %vm1445, %v1419, 0
      %1449 = vmatpush.bf16.msra.mxu0 0
      %1450 = vmatpush.bf16.msra.mxu0 0
      %1451 = vmatpush.bf16.msra.mxu0 0
      %1452 = vmatpush.bf16.msra.mxu0 0
      %1453 = vmatpush.bf16.msra.mxu0 0
      %1454 = vmatpush.bf16.msra.mxu0 0
      %1455 = vmatpush.bf16.msra.mxu0 0
      %1456 = vmatpush.bf16.msra.mxu0 %v1447
      %1457 = vmatmul.bf16.gmra.mxu0 %v1422
      %v1458 = vpop.f32.mrf.mxu0
      %v1459 = vadd.f32 0.0, %v1458
      %v1460 = vpop.f32.mrf.mxu0
      %v1461 = vadd.f32 0.0, %v1460
      %1462 = vmatmul.bf16.gmra.mxu0 %v1425
      %v1463 = vpop.f32.mrf.mxu0
      %v1464 = vadd.f32 0.0, %v1463
      %v1465 = vpop.f32.mrf.mxu0
      %v1466 = vadd.f32 0.0, %v1465
      %1467 = vmatmul.bf16.gmra.mxu0 %v1428
      %v1468 = vpop.f32.mrf.mxu0
      %v1469 = vadd.f32 0.0, %v1468
      %v1470 = vpop.f32.mrf.mxu0
      %v1471 = vadd.f32 0.0, %v1470
      %1472 = vmatmul.bf16.gmra.mxu0 %v1431
      %v1473 = vpop.f32.mrf.mxu0
      %v1474 = vadd.f32 0.0, %v1473
      %v1475 = vpop.f32.mrf.mxu0
      %v1476 = vadd.f32 0.0, %v1475
      %1477 = vmatmul.bf16.gmra.mxu0 %v1434
      %v1478 = vpop.f32.mrf.mxu0
      %v1479 = vadd.f32 0.0, %v1478
      %v1480 = vpop.f32.mrf.mxu0
      %v1481 = vadd.f32 0.0, %v1480
      %1482 = vmatmul.bf16.gmra.mxu0 %v1437
      %v1483 = vpop.f32.mrf.mxu0
      %v1484 = vadd.f32 0.0, %v1483
      %v1485 = vpop.f32.mrf.mxu0
      %v1486 = vadd.f32 0.0, %v1485
      %1487 = vmatmul.bf16.gmra.mxu0 %v1440
      %v1488 = vpop.f32.mrf.mxu0
      %v1489 = vadd.f32 0.0, %v1488
      %v1490 = vpop.f32.mrf.mxu0
      %v1491 = vadd.f32 0.0, %v1490
      %1492 = vmatmul.bf16.gmra.mxu0 %v1443
      %v1493 = vpop.f32.mrf.mxu0
      %v1494 = vadd.f32 0.0, %v1493
      %v1495 = vpop.f32.mrf.mxu0
      %v1496 = vadd.f32 0.0, %v1495
      %1497 = vdwg.mxu0
      %v1505 = vunpack.c.l.b16 %v1372
      %v1506 = vunpack.c.l.b16 %v1373
      %v1507 = vunpack.c.l.b16 %v1374
      %v1508 = vunpack.c.l.b16 %v1375
      %v1509 = vunpack.c.l.b16 %v1376
      %v1510 = vunpack.c.l.b16 %v1377
      %v1511 = vunpack.c.l.b16 %v1378
      %v1512 = vpack.c.b16 %v1506, %v1505
      %v1513 = vpack.c.b16 %v1508, %v1507
      %v1514 = vpack.c.b16 %v1510, %v1509
      %v1515 = vpack.c.b16 %v1511, %v1511
      %v1520 = vsel %vm943, %v1364, 0
      %v1523 = vsel %vm943, %v1365, 0
      %v1526 = vsel %vm943, %v1366, 0
      %v1529 = vsel %vm943, %v1367, 0
      %v1532 = vsel %vm943, %v1368, 0
      %v1535 = vsel %vm943, %v1369, 0
      %v1538 = vsel %vm943, %v1370, 0
      %v1541 = vsel %vm943, %v1371, 0
      %v1544 = vsel %vm968, %v1515, 0
      %1546 = vmatpush.bf16.msra.mxu0 0
      %1547 = vmatpush.bf16.msra.mxu0 0
      %1548 = vmatpush.bf16.msra.mxu0 0
      %1549 = vmatpush.bf16.msra.mxu0 0
      %1550 = vmatpush.bf16.msra.mxu0 %v1544
      %1551 = vmatpush.bf16.msra.mxu0 %v1514
      %1552 = vmatpush.bf16.msra.mxu0 %v1513
      %1553 = vmatpush.bf16.msra.mxu0 %v1512
      %1554 = vmatmul.bf16.gmra.mxu0 %v1520
      %v1555 = vpop.f32.mrf.mxu0
      %v1556 = vadd.f32 %v1459, %v1555
      %v1557 = vpop.f32.mrf.mxu0
      %v1558 = vadd.f32 %v1461, %v1557
      %1559 = vmatmul.bf16.gmra.mxu0 %v1523
      %v1560 = vpop.f32.mrf.mxu0
      %v1561 = vadd.f32 %v1464, %v1560
      %v1562 = vpop.f32.mrf.mxu0
      %v1563 = vadd.f32 %v1466, %v1562
      %1564 = vmatmul.bf16.gmra.mxu0 %v1526
      %v1565 = vpop.f32.mrf.mxu0
      %v1566 = vadd.f32 %v1469, %v1565
      %v1567 = vpop.f32.mrf.mxu0
      %v1568 = vadd.f32 %v1471, %v1567
      %1569 = vmatmul.bf16.gmra.mxu0 %v1529
      %v1570 = vpop.f32.mrf.mxu0
      %v1571 = vadd.f32 %v1474, %v1570
      %v1572 = vpop.f32.mrf.mxu0
      %v1573 = vadd.f32 %v1476, %v1572
      %1574 = vmatmul.bf16.gmra.mxu0 %v1532
      %v1575 = vpop.f32.mrf.mxu0
      %v1576 = vadd.f32 %v1479, %v1575
      %v1577 = vpop.f32.mrf.mxu0
      %v1578 = vadd.f32 %v1481, %v1577
      %1579 = vmatmul.bf16.gmra.mxu0 %v1535
      %v1580 = vpop.f32.mrf.mxu0
      %v1581 = vadd.f32 %v1484, %v1580
      %v1582 = vpop.f32.mrf.mxu0
      %v1583 = vadd.f32 %v1486, %v1582
      %1584 = vmatmul.bf16.gmra.mxu0 %v1538
      %v1585 = vpop.f32.mrf.mxu0
      %v1586 = vadd.f32 %v1489, %v1585
      %v1587 = vpop.f32.mrf.mxu0
      %v1588 = vadd.f32 %v1491, %v1587
      %1589 = vmatmul.bf16.gmra.mxu0 %v1541
      %v1590 = vpop.f32.mrf.mxu0
      %v1591 = vadd.f32 %v1494, %v1590
      %v1592 = vpop.f32.mrf.mxu0
      %v1593 = vadd.f32 %v1496, %v1592
      %1594 = vdwg.mxu0
      %v1595 = vld [vmem:[%s447] sm:$0xf]
      %v1596 = vld [vmem:[%s447 + $0x4] sm:$0xf]
      %v1597 = vld [vmem:[%s447 + $0x8] sm:$0xf]
      %v1598 = vld [vmem:[%s447 + $0xc] sm:$0xf]
      %v1599 = vld [vmem:[%s447 + $0x10] sm:$0xf]
      %v1600 = vld [vmem:[%s447 + $0x14] sm:$0xf]
      %v1601 = vld [vmem:[%s447 + $0x18] sm:$0xf]
      %v1602 = vld [vmem:[%s447 + $0x1c] sm:$0xf]
      %v1603 = vld [vmem:[%s447 + $0x20] sm:$0xf]
      %v1604 = vld [vmem:[%s447 + $0x24] sm:$0xf]
      %v1605 = vld [vmem:[%s447 + $0x28] sm:$0xf]
      %v1606 = vld [vmem:[%s447 + $0x2c] sm:$0xf]
      %v1607 = vld [vmem:[%s447 + $0x30] sm:$0xf]
      %v1608 = vld [vmem:[%s447 + $0x34] sm:$0xf]
      %v1609 = vld [vmem:[%s447 + $0x38] sm:$0xf]
      %v1610 = vld [vmem:[%s447 + $0x3c] sm:$0xf]
      %v1611 = vpack.c.bf16 %v1558, %v1556
      %v1612 = vpack.c.bf16 %v1563, %v1561
      %v1613 = vpack.c.bf16 %v1568, %v1566
      %v1614 = vpack.c.bf16 %v1573, %v1571
      %v1615 = vpack.c.bf16 %v1578, %v1576
      %v1616 = vpack.c.bf16 %v1583, %v1581
      %v1617 = vpack.c.bf16 %v1588, %v1586
      %v1618 = vpack.c.bf16 %v1593, %v1591
      %v1619 = vld [vmem:[%s8] sm:$0x1]
      %v1621 = vperm.slane %v1619, 0
      %v1639 = vunpack.c.l.b16 %v1595
      %v1640 = vunpack.c.l.b16 %v1596
      %v1641 = vunpack.c.l.b16 %v1597
      %v1642 = vunpack.c.l.b16 %v1598
      %v1643 = vunpack.c.l.b16 %v1599
      %v1644 = vunpack.c.l.b16 %v1600
      %v1645 = vunpack.c.l.b16 %v1601
      %v1646 = vunpack.c.l.b16 %v1602
      %v1647 = vunpack.c.l.b16 %v1603
      %v1648 = vunpack.c.l.b16 %v1604
      %v1649 = vunpack.c.l.b16 %v1605
      %v1650 = vunpack.c.l.b16 %v1606
      %v1651 = vunpack.c.l.b16 %v1607
      %v1652 = vunpack.c.l.b16 %v1608
      %v1653 = vunpack.c.l.b16 %v1609
      %v1654 = vunpack.c.l.b16 %v1610
      %v1655 = vpack.c.b16 %v1640, %v1639
      %v1656 = vpack.c.b16 %v1642, %v1641
      %v1657 = vpack.c.b16 %v1644, %v1643
      %v1658 = vpack.c.b16 %v1646, %v1645
      %v1659 = vpack.c.b16 %v1648, %v1647
      %v1660 = vpack.c.b16 %v1650, %v1649
      %v1661 = vpack.c.b16 %v1652, %v1651
      %v1662 = vpack.c.b16 %v1654, %v1653
      %1671 = vmatpush.bf16.msra.mxu0 %v1618
      %1672 = vmatpush.bf16.msra.mxu0 %v1617
      %1673 = vmatpush.bf16.msra.mxu0 %v1616
      %1674 = vmatpush.bf16.msra.mxu0 %v1615
      %1675 = vmatpush.bf16.msra.mxu0 %v1614
      %1676 = vmatpush.bf16.msra.mxu0 %v1613
      %1677 = vmatpush.bf16.msra.mxu0 %v1612
      %1678 = vmatpush.bf16.msra.mxu0 %v1611
      %1679 = vmatmul.bf16.gmra.mxu0 %v1655
      %v1680 = vpop.f32.mrf.mxu0
      %v1681 = vadd.f32 %v1621, %v1680
      %v1682 = vpop.f32.mrf.mxu0
      %v1683 = vadd.f32 %v1621, %v1682
      %1684 = vmatmul.bf16.gmra.mxu0 %v1656
      %v1685 = vpop.f32.mrf.mxu0
      %v1686 = vadd.f32 %v1621, %v1685
      %v1687 = vpop.f32.mrf.mxu0
      %v1688 = vadd.f32 %v1621, %v1687
      %1689 = vmatmul.bf16.gmra.mxu0 %v1657
      %v1690 = vpop.f32.mrf.mxu0
      %v1691 = vadd.f32 %v1621, %v1690
      %v1692 = vpop.f32.mrf.mxu0
      %v1693 = vadd.f32 %v1621, %v1692
      %1694 = vmatmul.bf16.gmra.mxu0 %v1658
      %v1695 = vpop.f32.mrf.mxu0
      %v1696 = vadd.f32 %v1621, %v1695
      %v1697 = vpop.f32.mrf.mxu0
      %v1698 = vadd.f32 %v1621, %v1697
      %1699 = vmatmul.bf16.gmra.mxu0 %v1659
      %v1700 = vpop.f32.mrf.mxu0
      %v1701 = vadd.f32 %v1621, %v1700
      %v1702 = vpop.f32.mrf.mxu0
      %v1703 = vadd.f32 %v1621, %v1702
      %1704 = vmatmul.bf16.gmra.mxu0 %v1660
      %v1705 = vpop.f32.mrf.mxu0
      %v1706 = vadd.f32 %v1621, %v1705
      %v1707 = vpop.f32.mrf.mxu0
      %v1708 = vadd.f32 %v1621, %v1707
      %1709 = vmatmul.bf16.gmra.mxu0 %v1661
      %v1710 = vpop.f32.mrf.mxu0
      %v1711 = vadd.f32 %v1621, %v1710
      %v1712 = vpop.f32.mrf.mxu0
      %v1713 = vadd.f32 %v1621, %v1712
      %1714 = vmatmul.bf16.gmra.mxu0 %v1662
      %v1715 = vpop.f32.mrf.mxu0
      %v1716 = vadd.f32 %v1621, %v1715
      %v1717 = vpop.f32.mrf.mxu0
      %v1718 = vadd.f32 %v1621, %v1717
      %1719 = vdwg.mxu0
      %v1720 = vmul.f32 %v1681, %v1681
      %v1721 = vmul.f32 %v1683, %v1683
      %v1722 = vmul.f32 %v1686, %v1686
      %v1723 = vmul.f32 %v1688, %v1688
      %v1724 = vmul.f32 %v1691, %v1691
      %v1725 = vmul.f32 %v1693, %v1693
      %v1726 = vmul.f32 %v1696, %v1696
      %v1727 = vmul.f32 %v1698, %v1698
      %v1728 = vmul.f32 %v1701, %v1701
      %v1729 = vmul.f32 %v1703, %v1703
      %v1730 = vmul.f32 %v1706, %v1706
      %v1731 = vmul.f32 %v1708, %v1708
      %v1732 = vmul.f32 %v1711, %v1711
      %v1733 = vmul.f32 %v1713, %v1713
      %v1734 = vmul.f32 %v1716, %v1716
      %v1735 = vmul.f32 %v1718, %v1718
      %vm1736 = vcmask 261120
      %v1737 = vsel %vm1736, %v1720, 0.0
      %1738 = vadd.xlane.f32.xlu0 %v1737
      %v1739 = vpop.xlane.xlu0 %1738
      %v1740 = vsel %vm1736, %v1721, 0.0
      %1741 = vadd.xlane.f32.xlu0 %v1740
      %v1742 = vpop.xlane.xlu0 %1741
      %v1743 = vsel %vm1736, %v1722, 0.0
      %1744 = vadd.xlane.f32.xlu0 %v1743
      %v1745 = vpop.xlane.xlu0 %1744
      %v1746 = vsel %vm1736, %v1723, 0.0
      %1747 = vadd.xlane.f32.xlu0 %v1746
      %v1748 = vpop.xlane.xlu0 %1747
      %v1749 = vsel %vm1736, %v1724, 0.0
      %1750 = vadd.xlane.f32.xlu0 %v1749
      %v1751 = vpop.xlane.xlu0 %1750
      %v1752 = vsel %vm1736, %v1725, 0.0
      %1753 = vadd.xlane.f32.xlu0 %v1752
      %v1754 = vpop.xlane.xlu0 %1753
      %v1755 = vsel %vm1736, %v1726, 0.0
      %1756 = vadd.xlane.f32.xlu0 %v1755
      %v1757 = vpop.xlane.xlu0 %1756
      %v1758 = vsel %vm1736, %v1727, 0.0
      %1759 = vadd.xlane.f32.xlu0 %v1758
      %v1760 = vpop.xlane.xlu0 %1759
      %v1761 = vsel %vm1736, %v1728, 0.0
      %1762 = vadd.xlane.f32.xlu0 %v1761
      %v1763 = vpop.xlane.xlu0 %1762
      %v1764 = vsel %vm1736, %v1729, 0.0
      %1765 = vadd.xlane.f32.xlu0 %v1764
      %v1766 = vpop.xlane.xlu0 %1765
      %v1767 = vsel %vm1736, %v1730, 0.0
      %1768 = vadd.xlane.f32.xlu0 %v1767
      %v1769 = vpop.xlane.xlu0 %1768
      %v1770 = vsel %vm1736, %v1731, 0.0
      %1771 = vadd.xlane.f32.xlu0 %v1770
      %v1772 = vpop.xlane.xlu0 %1771
      %v1773 = vsel %vm1736, %v1732, 0.0
      %1774 = vadd.xlane.f32.xlu0 %v1773
      %v1775 = vpop.xlane.xlu0 %1774
      %v1776 = vsel %vm1736, %v1733, 0.0
      %1777 = vadd.xlane.f32.xlu0 %v1776
      %v1778 = vpop.xlane.xlu0 %1777
      %v1779 = vsel %vm1736, %v1734, 0.0
      %1780 = vadd.xlane.f32.xlu0 %v1779
      %v1781 = vpop.xlane.xlu0 %1780
      %v1782 = vsel %vm1736, %v1735, 0.0
      %1783 = vadd.xlane.f32.xlu0 %v1782
      %v1784 = vpop.xlane.xlu0 %1783
      %v1785 = vmax.f32 %v1739, 1e-24
      %v1786 = vmax.f32 %v1742, 1e-24
      %v1787 = vmax.f32 %v1745, 1e-24
      %v1788 = vmax.f32 %v1748, 1e-24
      %v1789 = vmax.f32 %v1751, 1e-24
      %v1790 = vmax.f32 %v1754, 1e-24
      %v1791 = vmax.f32 %v1757, 1e-24
      %v1792 = vmax.f32 %v1760, 1e-24
      %v1793 = vmax.f32 %v1763, 1e-24
      %v1794 = vmax.f32 %v1766, 1e-24
      %v1795 = vmax.f32 %v1769, 1e-24
      %v1796 = vmax.f32 %v1772, 1e-24
      %v1797 = vmax.f32 %v1775, 1e-24
      %v1798 = vmax.f32 %v1778, 1e-24
      %v1799 = vmax.f32 %v1781, 1e-24
      %v1800 = vmax.f32 %v1784, 1e-24
      %v1801 = vrsqrt.pop %v1785
      %v1802 = vmul.f32 %v1801, %v1785
      %v1803 = vmul.f32 %v1802, %v1801
      %v1804 = vmul.f32 0.5, %v1803
      %v1805 = vsub.f32 1.5, %v1804
      %v1806 = vmul.f32 %v1801, %v1805
      %vm1807 = vweird.f32 %v1785
      %vm1808 = vweird.f32 %v1801
      %vm1809 = vmor %vm1807, %vm1808
      %v1810 = vsel %vm1809, %v1801, %v1806
      %v1811 = vrsqrt.pop %v1786
      %v1812 = vmul.f32 %v1811, %v1786
      %v1813 = vmul.f32 %v1812, %v1811
      %v1814 = vmul.f32 0.5, %v1813
      %v1815 = vsub.f32 1.5, %v1814
      %v1816 = vmul.f32 %v1811, %v1815
      %vm1817 = vweird.f32 %v1786
      %vm1818 = vweird.f32 %v1811
      %vm1819 = vmor %vm1817, %vm1818
      %v1820 = vsel %vm1819, %v1811, %v1816
      %v1821 = vrsqrt.pop %v1787
      %v1822 = vmul.f32 %v1821, %v1787
      %v1823 = vmul.f32 %v1822, %v1821
      %v1824 = vmul.f32 0.5, %v1823
      %v1825 = vsub.f32 1.5, %v1824
      %v1826 = vmul.f32 %v1821, %v1825
      %vm1827 = vweird.f32 %v1787
      %vm1828 = vweird.f32 %v1821
      %vm1829 = vmor %vm1827, %vm1828
      %v1830 = vsel %vm1829, %v1821, %v1826
      %v1831 = vrsqrt.pop %v1788
      %v1832 = vmul.f32 %v1831, %v1788
      %v1833 = vmul.f32 %v1832, %v1831
      %v1834 = vmul.f32 0.5, %v1833
      %v1835 = vsub.f32 1.5, %v1834
      %v1836 = vmul.f32 %v1831, %v1835
      %vm1837 = vweird.f32 %v1788
      %vm1838 = vweird.f32 %v1831
      %vm1839 = vmor %vm1837, %vm1838
      %v1840 = vsel %vm1839, %v1831, %v1836
      %v1841 = vrsqrt.pop %v1789
      %v1842 = vmul.f32 %v1841, %v1789
      %v1843 = vmul.f32 %v1842, %v1841
      %v1844 = vmul.f32 0.5, %v1843
      %v1845 = vsub.f32 1.5, %v1844
      %v1846 = vmul.f32 %v1841, %v1845
      %vm1847 = vweird.f32 %v1789
      %vm1848 = vweird.f32 %v1841
      %vm1849 = vmor %vm1847, %vm1848
      %v1850 = vsel %vm1849, %v1841, %v1846
      %v1851 = vrsqrt.pop %v1790
      %v1852 = vmul.f32 %v1851, %v1790
      %v1853 = vmul.f32 %v1852, %v1851
      %v1854 = vmul.f32 0.5, %v1853
      %v1855 = vsub.f32 1.5, %v1854
      %v1856 = vmul.f32 %v1851, %v1855
      %vm1857 = vweird.f32 %v1790
      %vm1858 = vweird.f32 %v1851
      %vm1859 = vmor %vm1857, %vm1858
      %v1860 = vsel %vm1859, %v1851, %v1856
      %v1861 = vrsqrt.pop %v1791
      %v1862 = vmul.f32 %v1861, %v1791
      %v1863 = vmul.f32 %v1862, %v1861
      %v1864 = vmul.f32 0.5, %v1863
      %v1865 = vsub.f32 1.5, %v1864
      %v1866 = vmul.f32 %v1861, %v1865
      %vm1867 = vweird.f32 %v1791
      %vm1868 = vweird.f32 %v1861
      %vm1869 = vmor %vm1867, %vm1868
      %v1870 = vsel %vm1869, %v1861, %v1866
      %v1871 = vrsqrt.pop %v1792
      %v1872 = vmul.f32 %v1871, %v1792
      %v1873 = vmul.f32 %v1872, %v1871
      %v1874 = vmul.f32 0.5, %v1873
      %v1875 = vsub.f32 1.5, %v1874
      %v1876 = vmul.f32 %v1871, %v1875
      %vm1877 = vweird.f32 %v1792
      %vm1878 = vweird.f32 %v1871
      %vm1879 = vmor %vm1877, %vm1878
      %v1880 = vsel %vm1879, %v1871, %v1876
      %v1881 = vrsqrt.pop %v1793
      %v1882 = vmul.f32 %v1881, %v1793
      %v1883 = vmul.f32 %v1882, %v1881
      %v1884 = vmul.f32 0.5, %v1883
      %v1885 = vsub.f32 1.5, %v1884
      %v1886 = vmul.f32 %v1881, %v1885
      %vm1887 = vweird.f32 %v1793
      %vm1888 = vweird.f32 %v1881
      %vm1889 = vmor %vm1887, %vm1888
      %v1890 = vsel %vm1889, %v1881, %v1886
      %v1891 = vrsqrt.pop %v1794
      %v1892 = vmul.f32 %v1891, %v1794
      %v1893 = vmul.f32 %v1892, %v1891
      %v1894 = vmul.f32 0.5, %v1893
      %v1895 = vsub.f32 1.5, %v1894
      %v1896 = vmul.f32 %v1891, %v1895
      %vm1897 = vweird.f32 %v1794
      %vm1898 = vweird.f32 %v1891
      %vm1899 = vmor %vm1897, %vm1898
      %v1900 = vsel %vm1899, %v1891, %v1896
      %v1901 = vrsqrt.pop %v1795
      %v1902 = vmul.f32 %v1901, %v1795
      %v1903 = vmul.f32 %v1902, %v1901
      %v1904 = vmul.f32 0.5, %v1903
      %v1905 = vsub.f32 1.5, %v1904
      %v1906 = vmul.f32 %v1901, %v1905
      %vm1907 = vweird.f32 %v1795
      %vm1908 = vweird.f32 %v1901
      %vm1909 = vmor %vm1907, %vm1908
      %v1910 = vsel %vm1909, %v1901, %v1906
      %v1911 = vrsqrt.pop %v1796
      %v1912 = vmul.f32 %v1911, %v1796
      %v1913 = vmul.f32 %v1912, %v1911
      %v1914 = vmul.f32 0.5, %v1913
      %v1915 = vsub.f32 1.5, %v1914
      %v1916 = vmul.f32 %v1911, %v1915
      %vm1917 = vweird.f32 %v1796
      %vm1918 = vweird.f32 %v1911
      %vm1919 = vmor %vm1917, %vm1918
      %v1920 = vsel %vm1919, %v1911, %v1916
      %v1921 = vrsqrt.pop %v1797
      %v1922 = vmul.f32 %v1921, %v1797
      %v1923 = vmul.f32 %v1922, %v1921
      %v1924 = vmul.f32 0.5, %v1923
      %v1925 = vsub.f32 1.5, %v1924
      %v1926 = vmul.f32 %v1921, %v1925
      %vm1927 = vweird.f32 %v1797
      %vm1928 = vweird.f32 %v1921
      %vm1929 = vmor %vm1927, %vm1928
      %v1930 = vsel %vm1929, %v1921, %v1926
      %v1931 = vrsqrt.pop %v1798
      %v1932 = vmul.f32 %v1931, %v1798
      %v1933 = vmul.f32 %v1932, %v1931
      %v1934 = vmul.f32 0.5, %v1933
      %v1935 = vsub.f32 1.5, %v1934
      %v1936 = vmul.f32 %v1931, %v1935
      %vm1937 = vweird.f32 %v1798
      %vm1938 = vweird.f32 %v1931
      %vm1939 = vmor %vm1937, %vm1938
      %v1940 = vsel %vm1939, %v1931, %v1936
      %v1941 = vrsqrt.pop %v1799
      %v1942 = vmul.f32 %v1941, %v1799
      %v1943 = vmul.f32 %v1942, %v1941
      %v1944 = vmul.f32 0.5, %v1943
      %v1945 = vsub.f32 1.5, %v1944
      %v1946 = vmul.f32 %v1941, %v1945
      %vm1947 = vweird.f32 %v1799
      %vm1948 = vweird.f32 %v1941
      %vm1949 = vmor %vm1947, %vm1948
      %v1950 = vsel %vm1949, %v1941, %v1946
      %v1951 = vrsqrt.pop %v1800
      %v1952 = vmul.f32 %v1951, %v1800
      %v1953 = vmul.f32 %v1952, %v1951
      %v1954 = vmul.f32 0.5, %v1953
      %v1955 = vsub.f32 1.5, %v1954
      %v1956 = vmul.f32 %v1951, %v1955
      %vm1957 = vweird.f32 %v1800
      %vm1958 = vweird.f32 %v1951
      %vm1959 = vmor %vm1957, %vm1958
      %v1960 = vsel %vm1959, %v1951, %v1956
      %v1961 = vmul.f32 %v1681, %v1810
      %v1962 = vmul.f32 %v1683, %v1820
      %v1963 = vmul.f32 %v1686, %v1830
      %v1964 = vmul.f32 %v1688, %v1840
      %v1965 = vmul.f32 %v1691, %v1850
      %v1966 = vmul.f32 %v1693, %v1860
      %v1967 = vmul.f32 %v1696, %v1870
      %v1968 = vmul.f32 %v1698, %v1880
      %v1969 = vmul.f32 %v1701, %v1890
      %v1970 = vmul.f32 %v1703, %v1900
      %v1971 = vmul.f32 %v1706, %v1910
      %v1972 = vmul.f32 %v1708, %v1920
      %v1973 = vmul.f32 %v1711, %v1930
      %v1974 = vmul.f32 %v1713, %v1940
      %v1975 = vmul.f32 %v1716, %v1950
      %v1976 = vmul.f32 %v1718, %v1960
      %v1977 = vmax.f32 %v1961, 0.0
      %v1978 = vmax.f32 %v1962, 0.0
      %v1979 = vmax.f32 %v1963, 0.0
      %v1980 = vmax.f32 %v1964, 0.0
      %v1981 = vmax.f32 %v1965, 0.0
      %v1982 = vmax.f32 %v1966, 0.0
      %v1983 = vmax.f32 %v1967, 0.0
      %v1984 = vmax.f32 %v1968, 0.0
      %v1985 = vmax.f32 %v1969, 0.0
      %v1986 = vmax.f32 %v1970, 0.0
      %v1987 = vmax.f32 %v1971, 0.0
      %v1988 = vmax.f32 %v1972, 0.0
      %v1989 = vmax.f32 %v1973, 0.0
      %v1990 = vmax.f32 %v1974, 0.0
      %v1991 = vmax.f32 %v1975, 0.0
      %v1992 = vmax.f32 %v1976, 0.0
      %v1993 = vsel %vm1736, %v1977, -inf
      %v1994 = vsel %vm1736, %v1978, -inf
      %v1995 = vmax.f32 %v1993, %v1994
      %v1996 = vrot.slane %v1995, 4
      %v1997 = vmax.f32 %v1995, %v1996
      %v1998 = vrot.slane %v1997, 2
      %v1999 = vmax.f32 %v1997, %v1998
      %v2000 = vrot.slane %v1999, 1
      %v2001 = vmax.f32 %v1999, %v2000
      %v2002 = vsel %vm1736, %v1979, -inf
      %v2003 = vsel %vm1736, %v1980, -inf
      %v2004 = vmax.f32 %v2002, %v2003
      %v2005 = vrot.slane %v2004, 4
      %v2006 = vmax.f32 %v2004, %v2005
      %v2007 = vrot.slane %v2006, 2
      %v2008 = vmax.f32 %v2006, %v2007
      %v2009 = vrot.slane %v2008, 1
      %v2010 = vmax.f32 %v2008, %v2009
      %v2011 = vsel %vm1736, %v1981, -inf
      %v2012 = vsel %vm1736, %v1982, -inf
      %v2013 = vmax.f32 %v2011, %v2012
      %v2014 = vrot.slane %v2013, 4
      %v2015 = vmax.f32 %v2013, %v2014
      %v2016 = vrot.slane %v2015, 2
      %v2017 = vmax.f32 %v2015, %v2016
      %v2018 = vrot.slane %v2017, 1
      %v2019 = vmax.f32 %v2017, %v2018
      %v2020 = vsel %vm1736, %v1983, -inf
      %v2021 = vsel %vm1736, %v1984, -inf
      %v2022 = vmax.f32 %v2020, %v2021
      %v2023 = vrot.slane %v2022, 4
      %v2024 = vmax.f32 %v2022, %v2023
      %v2025 = vrot.slane %v2024, 2
      %v2026 = vmax.f32 %v2024, %v2025
      %v2027 = vrot.slane %v2026, 1
      %v2028 = vmax.f32 %v2026, %v2027
      %v2029 = vsel %vm1736, %v1985, -inf
      %v2030 = vsel %vm1736, %v1986, -inf
      %v2031 = vmax.f32 %v2029, %v2030
      %v2032 = vrot.slane %v2031, 4
      %v2033 = vmax.f32 %v2031, %v2032
      %v2034 = vrot.slane %v2033, 2
      %v2035 = vmax.f32 %v2033, %v2034
      %v2036 = vrot.slane %v2035, 1
      %v2037 = vmax.f32 %v2035, %v2036
      %v2038 = vsel %vm1736, %v1987, -inf
      %v2039 = vsel %vm1736, %v1988, -inf
      %v2040 = vmax.f32 %v2038, %v2039
      %v2041 = vrot.slane %v2040, 4
      %v2042 = vmax.f32 %v2040, %v2041
      %v2043 = vrot.slane %v2042, 2
      %v2044 = vmax.f32 %v2042, %v2043
      %v2045 = vrot.slane %v2044, 1
      %v2046 = vmax.f32 %v2044, %v2045
      %v2047 = vsel %vm1736, %v1989, -inf
      %v2048 = vsel %vm1736, %v1990, -inf
      %v2049 = vmax.f32 %v2047, %v2048
      %v2050 = vrot.slane %v2049, 4
      %v2051 = vmax.f32 %v2049, %v2050
      %v2052 = vrot.slane %v2051, 2
      %v2053 = vmax.f32 %v2051, %v2052
      %v2054 = vrot.slane %v2053, 1
      %v2055 = vmax.f32 %v2053, %v2054
      %v2056 = vsel %vm1736, %v1991, -inf
      %v2057 = vsel %vm1736, %v1992, -inf
      %v2058 = vmax.f32 %v2056, %v2057
      %v2059 = vrot.slane %v2058, 4
      %v2060 = vmax.f32 %v2058, %v2059
      %v2061 = vrot.slane %v2060, 2
      %v2062 = vmax.f32 %v2060, %v2061
      %v2063 = vrot.slane %v2062, 1
      %v2064 = vmax.f32 %v2062, %v2063
      %v2065 = vsel %vm1736, %v1977, 0.0
      %v2066 = vsel %vm1736, %v1978, 0.0
      %v2067 = vadd.f32 %v2065, %v2066
      %v2068 = vrot.slane %v2067, 4
      %v2069 = vadd.f32 %v2067, %v2068
      %v2070 = vrot.slane %v2069, 2
      %v2071 = vadd.f32 %v2069, %v2070
      %v2072 = vrot.slane %v2071, 1
      %v2073 = vadd.f32 %v2071, %v2072
      %v2074 = vsel %vm1736, %v1979, 0.0
      %v2075 = vsel %vm1736, %v1980, 0.0
      %v2076 = vadd.f32 %v2074, %v2075
      %v2077 = vrot.slane %v2076, 4
      %v2078 = vadd.f32 %v2076, %v2077
      %v2079 = vrot.slane %v2078, 2
      %v2080 = vadd.f32 %v2078, %v2079
      %v2081 = vrot.slane %v2080, 1
      %v2082 = vadd.f32 %v2080, %v2081
      %v2083 = vsel %vm1736, %v1981, 0.0
      %v2084 = vsel %vm1736, %v1982, 0.0
      %v2085 = vadd.f32 %v2083, %v2084
      %v2086 = vrot.slane %v2085, 4
      %v2087 = vadd.f32 %v2085, %v2086
      %v2088 = vrot.slane %v2087, 2
      %v2089 = vadd.f32 %v2087, %v2088
      %v2090 = vrot.slane %v2089, 1
      %v2091 = vadd.f32 %v2089, %v2090
      %v2092 = vsel %vm1736, %v1983, 0.0
      %v2093 = vsel %vm1736, %v1984, 0.0
      %v2094 = vadd.f32 %v2092, %v2093
      %v2095 = vrot.slane %v2094, 4
      %v2096 = vadd.f32 %v2094, %v2095
      %v2097 = vrot.slane %v2096, 2
      %v2098 = vadd.f32 %v2096, %v2097
      %v2099 = vrot.slane %v2098, 1
      %v2100 = vadd.f32 %v2098, %v2099
      %v2101 = vsel %vm1736, %v1985, 0.0
      %v2102 = vsel %vm1736, %v1986, 0.0
      %v2103 = vadd.f32 %v2101, %v2102
      %v2104 = vrot.slane %v2103, 4
      %v2105 = vadd.f32 %v2103, %v2104
      %v2106 = vrot.slane %v2105, 2
      %v2107 = vadd.f32 %v2105, %v2106
      %v2108 = vrot.slane %v2107, 1
      %v2109 = vadd.f32 %v2107, %v2108
      %v2110 = vsel %vm1736, %v1987, 0.0
      %v2111 = vsel %vm1736, %v1988, 0.0
      %v2112 = vadd.f32 %v2110, %v2111
      %v2113 = vrot.slane %v2112, 4
      %v2114 = vadd.f32 %v2112, %v2113
      %v2115 = vrot.slane %v2114, 2
      %v2116 = vadd.f32 %v2114, %v2115
      %v2117 = vrot.slane %v2116, 1
      %v2118 = vadd.f32 %v2116, %v2117
      %v2119 = vsel %vm1736, %v1989, 0.0
      %v2120 = vsel %vm1736, %v1990, 0.0
      %v2121 = vadd.f32 %v2119, %v2120
      %v2122 = vrot.slane %v2121, 4
      %v2123 = vadd.f32 %v2121, %v2122
      %v2124 = vrot.slane %v2123, 2
      %v2125 = vadd.f32 %v2123, %v2124
      %v2126 = vrot.slane %v2125, 1
      %v2127 = vadd.f32 %v2125, %v2126
      %v2128 = vsel %vm1736, %v1991, 0.0
      %v2129 = vsel %vm1736, %v1992, 0.0
      %v2130 = vadd.f32 %v2128, %v2129
      %v2131 = vrot.slane %v2130, 4
      %v2132 = vadd.f32 %v2130, %v2131
      %v2133 = vrot.slane %v2132, 2
      %v2134 = vadd.f32 %v2132, %v2133
      %v2135 = vrot.slane %v2134, 1
      %v2136 = vadd.f32 %v2134, %v2135
      %v2137 = vrcp.pop 16.0
      %v2138 = vmul.f32 16.0, %v2137
      %v2139 = vsub.f32 1.0, %v2138
      %v2140 = vmul.f32 %v2137, %v2139
      %v2141 = vadd.f32 %v2137, %v2140
      %vm2142 = vweird.f32 %v2137
      %v2143 = vsel %vm2142, %v2137, %v2141
      %v2144 = vmul.f32 %v2073, %v2143
      %v2145 = vmul.f32 %v2082, %v2143
      %v2146 = vmul.f32 %v2091, %v2143
      %v2147 = vmul.f32 %v2100, %v2143
      %v2148 = vmul.f32 %v2109, %v2143
      %v2149 = vmul.f32 %v2118, %v2143
      %v2150 = vmul.f32 %v2127, %v2143
      %v2151 = vmul.f32 %v2136, %v2143
      %v2152 = vpack.c.bf16 %v2001, %v2001
      %v2153 = vpack.c.bf16 %v2010, %v2010
      %v2154 = vpack.c.bf16 %v2019, %v2019
      %v2155 = vpack.c.bf16 %v2028, %v2028
      %v2156 = vpack.c.bf16 %v2037, %v2037
      %v2157 = vpack.c.bf16 %v2046, %v2046
      %v2158 = vpack.c.bf16 %v2055, %v2055
      %v2159 = vpack.c.bf16 %v2064, %v2064
      %v2160 = vld [vmem:[%s9] sm:$0xf]
      %v2161 = vld [vmem:[%s9 + $0x4] sm:$0xf]
      %v2162 = vld [vmem:[%s9 + $0x8] sm:$0xf]
      %v2163 = vld [vmem:[%s9 + $0xc] sm:$0xf]
      %v2164 = vpack.c.bf16 %v2144, %v2144
      %v2165 = vpack.c.bf16 %v2145, %v2145
      %v2166 = vpack.c.bf16 %v2146, %v2146
      %v2167 = vpack.c.bf16 %v2147, %v2147
      %v2168 = vpack.c.bf16 %v2148, %v2148
      %v2169 = vpack.c.bf16 %v2149, %v2149
      %v2170 = vpack.c.bf16 %v2150, %v2150
      %v2171 = vpack.c.bf16 %v2151, %v2151
      %v2172 = vld [vmem:[%s10] sm:$0xf]
      %v2173 = vld [vmem:[%s10 + $0x4] sm:$0xf]
      %v2174 = vld [vmem:[%s10 + $0x8] sm:$0xf]
      %v2175 = vld [vmem:[%s10 + $0xc] sm:$0xf]
      %v2184 = vunpack.c.l.b16 %v2164
      %v2185 = vunpack.c.l.b16 %v2165
      %v2186 = vunpack.c.l.b16 %v2166
      %v2187 = vunpack.c.l.b16 %v2167
      %v2188 = vunpack.c.l.b16 %v2168
      %v2189 = vunpack.c.l.b16 %v2169
      %v2190 = vunpack.c.l.b16 %v2170
      %v2191 = vunpack.c.l.b16 %v2171
      %vm2192 = vcmask 1041409
      %v2193 = vsel %vm2192, %v2185, %v2184
      %vm2194 = vcmask 1042434
      %v2195 = vsel %vm2194, %v2186, %v2193
      %vm2196 = vcmask 1043459
      %v2197 = vsel %vm2196, %v2187, %v2195
      %vm2198 = vcmask 1044484
      %v2199 = vsel %vm2198, %v2188, %v2197
      %vm2200 = vcmask 1045509
      %v2201 = vsel %vm2200, %v2189, %v2199
      %vm2202 = vcmask 1046534
      %v2203 = vsel %vm2202, %v2190, %v2201
      %vm2204 = vcmask 1047559
      %v2205 = vsel %vm2204, %v2191, %v2203
      %v2206 = vpack.c.b16 %v2205, %v2205
      %v2211 = vunpack.c.l.b16 %v2172
      %v2212 = vunpack.c.l.b16 %v2173
      %v2213 = vunpack.c.l.b16 %v2174
      %v2214 = vunpack.c.l.b16 %v2175
      %v2215 = vpack.c.b16 %v2212, %v2211
      %v2216 = vpack.c.b16 %v2214, %v2213
      %v2220 = vsel %vm1736, %v2206, 0
      %2222 = vmatpush.bf16.msra.mxu0 0
      %2223 = vmatpush.bf16.msra.mxu0 0
      %2224 = vmatpush.bf16.msra.mxu0 0
      %2225 = vmatpush.bf16.msra.mxu0 0
      %2226 = vmatpush.bf16.msra.mxu0 0
      %2227 = vmatpush.bf16.msra.mxu0 0
      %2228 = vmatpush.bf16.msra.mxu0 %v2216
      %2229 = vmatpush.bf16.msra.mxu0 %v2215
      %2230 = vmatmul.bf16.gmra.mxu0 %v2220
      %v2231 = vpop.f32.mrf.mxu0
      %v2232 = vadd.f32 0.0, %v2231
      %v2233 = vpop.f32.mrf.mxu0
      %2234 = vdwg.mxu0
      %v2243 = vunpack.c.l.b16 %v2152
      %v2244 = vunpack.c.l.b16 %v2153
      %v2245 = vunpack.c.l.b16 %v2154
      %v2246 = vunpack.c.l.b16 %v2155
      %v2247 = vunpack.c.l.b16 %v2156
      %v2248 = vunpack.c.l.b16 %v2157
      %v2249 = vunpack.c.l.b16 %v2158
      %v2250 = vunpack.c.l.b16 %v2159
      %v2251 = vsel %vm2192, %v2244, %v2243
      %v2252 = vsel %vm2194, %v2245, %v2251
      %v2253 = vsel %vm2196, %v2246, %v2252
      %v2254 = vsel %vm2198, %v2247, %v2253
      %v2255 = vsel %vm2200, %v2248, %v2254
      %v2256 = vsel %vm2202, %v2249, %v2255
      %v2257 = vsel %vm2204, %v2250, %v2256
      %v2258 = vpack.c.b16 %v2257, %v2257
      %v2263 = vunpack.c.l.b16 %v2160
      %v2264 = vunpack.c.l.b16 %v2161
      %v2265 = vunpack.c.l.b16 %v2162
      %v2266 = vunpack.c.l.b16 %v2163
      %v2267 = vpack.c.b16 %v2264, %v2263
      %v2268 = vpack.c.b16 %v2266, %v2265
      %v2272 = vsel %vm1736, %v2258, 0
      %2274 = vmatpush.bf16.msra.mxu0 0
      %2275 = vmatpush.bf16.msra.mxu0 0
      %2276 = vmatpush.bf16.msra.mxu0 0
      %2277 = vmatpush.bf16.msra.mxu0 0
      %2278 = vmatpush.bf16.msra.mxu0 0
      %2279 = vmatpush.bf16.msra.mxu0 0
      %2280 = vmatpush.bf16.msra.mxu0 %v2268
      %2281 = vmatpush.bf16.msra.mxu0 %v2267
      %2282 = vmatmul.bf16.gmra.mxu0 %v2272
      %v2283 = vpop.f32.mrf.mxu0
      %v2284 = vadd.f32 %v2232, %v2283
      %v2285 = vpop.f32.mrf.mxu0
      %2286 = vdwg.mxu0
      %v2287 = vld [vmem:[%s11] sm:$0x1]
      %v2289 = vperm.slane %v2287, 0
      %v2291 = vadd.f32 %v2284, %v2289
      %vm2292 = vcmask 31744
      %2293 = vst.msk [vmem:[%s451] sm:$0xff] %vm2292, %v2291
      %p2294 = scmp.lt.s32.totalorder %s23, 1
      %s2295 = scalar_select %p2294, %s23, 1
      %s2296 = smul.addr %s2295, 8
      %s2297 = scalar_lea.vmem %s12, %s2296
      // Predicated region
      $region69: #{tpu_custom_call.1} parent=67 // pred_check
        %p2298 = pneg %p308
      $region70: #{tpu_custom_call.1} parent=67 // pred_check_branch
        %2300 = sbr.rel (%p2298) target = $region72
      $region71: #{tpu_custom_call.1} parent=67 // pred_region
        _
      $region72: #{tpu_custom_call.1} parent=67 // pred_fallthru
        _
    $region68: #{tpu_custom_call.1} parent=5 // pred_fallthru
      _
    %p2301 = scmp.le.s32.totalorder 2, %s18
    // Predicated region
    $region73: #{tpu_custom_call.1} parent=5 // pred_check
      %p2302 = pneg %p2301
    $region74: #{tpu_custom_call.1} parent=5 // pred_check_branch
      %2304 = sbr.rel (%p2302) target = $region76
    $region75: #{tpu_custom_call.1} parent=5 // pred_region
      %s2305 = ssub.s32 %s18, 2
      // Predicated region
      $region77: #{tpu_custom_call.1} parent=75 // pred_check
        %p2306 = pneg %p314
      $region78: #{tpu_custom_call.1} parent=75 // pred_check_branch
        %2308 = sbr.rel (%p2306) target = $region80
      $region79: #{tpu_custom_call.1} parent=75 // pred_region
        %p2309 = scmp.lt.s32.totalorder %s24, 1
        %s2310 = scalar_select %p2309, %s24, 1
        %s2311 = smul.addr %s2310, 8
        %s2312 = scalar_lea.vmem %s12, %s2311
      $region80: #{tpu_custom_call.1} parent=75 // pred_fallthru
        _
    $region76: #{tpu_custom_call.1} parent=5 // pred_fallthru
      _
  $region6: #{tpu_custom_call.1} parent=0 // loop_footer
    %s22 = sadd.s32 1, %s18
  $region7: #{tpu_custom_call.1} parent=0 // loop_footer_branch
    %17 = sbr.rel target = $region3
  $region8: #{tpu_custom_call.1} parent=0 // loop_exit
    _

</llo_original>
